<compile_context>
chip_gen: v5e
topology: v5e:2x2
jax: 0.10.0
libtpu: 0.0.40
codegen_flags: <defaults>
</compile_context>

<pallas_src>
import functools

import jax
import jax.numpy as jnp
from jax import lax
from jax.experimental import pallas as pl
from jax.experimental.pallas import tpu as pltpu

HPAD = 128   # lane-dense padded hidden width (covers hid1=16 and hid2=32)
CPAD = 128   # lane-dense padded class width
_BF16 = 2
_F32 = 4


def _pad2(a, rows, cols, dtype=None):
    dtype = a.dtype if dtype is None else dtype
    out = jnp.zeros((rows, cols), dtype)
    return out.at[: a.shape[0], : a.shape[1]].set(a.astype(dtype))


# ----------------------------------------------------------------------------- kernel
def gcn_kernel(x_ref, a_ref, pool_ref, gf_ref,
               w1_ref, b1_ref, w2_ref, b2_ref,
               wfp_ref, wfg_ref, bf_ref,
               out_ref,
               proj1_ref, proj2_ref, pooled_ref,
               *, num_classes, row_tile, a_resident):
    l = pl.program_id(0)            # 0 = conv1, 1 = conv2 (+ pool / fc epilogue)
    i = pl.program_id(1)            # A row-tile index
    nt = pl.num_programs(1)

    # ---- very first grid step: prologue projection X @ W1 + zero pooled acc ----
    @pl.when((l == 0) & (i == 0))
    def _():
        p1 = jnp.dot(x_ref[...], w1_ref[...], preferred_element_type=jnp.float32)
        proj1_ref[...] = p1.astype(proj1_ref.dtype)        # (N, HPAD) bf16
        pooled_ref[...] = jnp.zeros_like(pooled_ref)

    row0 = pl.multiple_of(i * row_tile, row_tile)
    if a_resident:
        a_tile = a_ref[pl.ds(row0, row_tile), :]           # slice resident A
    else:
        a_tile = a_ref[...]                                 # streamed row tile

    # ---- layer 1: h1 = relu(A@proj1 + b1); fused proj2 = h1 @ W2 per tile ----
    @pl.when(l == 0)
    def _():
        msg = jnp.dot(a_tile, proj1_ref[...], preferred_element_type=jnp.float32)
        h1 = jnp.maximum(msg + b1_ref[...], 0.0)
        # TODO(synk): F.dropout(training=self.training) is identity in eval mode.
        p2 = jnp.dot(h1.astype(jnp.bfloat16), w2_ref[...],
                     preferred_element_type=jnp.float32)
        proj2_ref[pl.ds(row0, row_tile), :] = p2.astype(proj2_ref.dtype)

    # ---- layer 2: h2 = relu(A@proj2 + b2); accumulate global mean pool ----
    @pl.when(l == 1)
    def _():
        msg = jnp.dot(a_tile, proj2_ref[...], preferred_element_type=jnp.float32)
        h2 = jnp.maximum(msg + b2_ref[...], 0.0)            # (row_tile, HPAD) f32
        pooled_ref[...] += jnp.dot(pool_ref[...], h2,
                                   preferred_element_type=jnp.float32)   # (B, HPAD)

    # ---- last grid step: fc over [pooled, graph_features] + masked log_softmax ----
    @pl.when((l == 1) & (i == nt - 1))
    def _():
        z = (jnp.dot(pooled_ref[...], wfp_ref[...], preferred_element_type=jnp.float32)
             + jnp.dot(gf_ref[...], wfg_ref[...], preferred_element_type=jnp.float32)
             + bf_ref[...])
        col = lax.broadcasted_iota(jnp.int32, z.shape, 1)
        z = jnp.where(col < num_classes, z, -jnp.inf)        # mask lane padding
        m = jnp.max(z, axis=1, keepdims=True)
        lse = jnp.log(jnp.sum(jnp.exp(z - m), axis=1, keepdims=True)) + m
        out_ref[...] = z - lse


# ----------------------------------------------------------------------------- wrapper
@functools.partial(jax.jit, static_argnames=("num_classes", "row_tile", "a_resident"))
def gcn_forward(x, a_hat, pool, graph_feats, w1, b1, w2, b2, wf, bf,
                *, num_classes, row_tile=None, a_resident=None):
    N, f_in = x.shape
    B, G = graph_feats.shape
    hid2 = w2.shape[1]

    if row_tile is None:
        row_tile = N                              # single tile fallback
        for cand in (512, 384, 256, 128):         # biggest 128-multiple that divides N
            if N % cand == 0:
                row_tile = cand
                break
    assert N % row_tile == 0, "ragged node counts unsupported (pad A/pool with zeros)"
    assert row_tile == N or row_tile % 128 == 0, "row_tile must be lane-dense"
    n_tiles = N // row_tile

    if a_resident is None:
        # Whole-array A residency only when 2 pipeline buffers of (N,N) bf16 plus the
        # bf16 projection scratch comfortably fit the smallest generation (v7x 64 MiB).
        a_resident = (2 * N * N * _BF16 + 2 * N * HPAD * _BF16) <= 40 * 1024 * 1024

    # MXU operands -> bf16 (halves HBM/VMEM traffic of every matmul input); f32 acc.
    x16 = x.astype(jnp.bfloat16)
    a16 = a_hat.astype(jnp.bfloat16)   # TODO(synk): fp8(e4m3) A_hat path for v7x MXU.
    w1p = _pad2(w1, f_in, HPAD, jnp.bfloat16)
    w2p = _pad2(w2, HPAD, HPAD, jnp.bfloat16)
    b1p = _pad2(b1.reshape(1, -1), 1, HPAD)                 # f32
    b2p = _pad2(b2.reshape(1, -1), 1, HPAD)
    wfp = _pad2(wf[:hid2], HPAD, CPAD)                      # concat-fc, pooled part
    wfg = _pad2(wf[hid2:], G, CPAD)                         # concat-fc, graph-feat part
    bfp = _pad2(bf.reshape(1, -1), 1, CPAD)
    pool = pool.astype(jnp.float32)                         # (B, N), lane-dense tiles

    def whole(shape):
        return pl.BlockSpec(shape, lambda l, i: (0, 0))

    a_spec = (pl.BlockSpec((N, N), lambda l, i: (0, 0)) if a_resident
              else pl.BlockSpec((row_tile, N), lambda l, i: (i, 0)))

    in_specs = [
        whole((N, f_in)),                                   # x (bf16)
        a_spec,                                             # A_hat (bf16)
        pl.BlockSpec((B, row_tile), lambda l, i: (0, i)),   # pool row tiles (lane-dense)
        whole((B, G)),                                      # graph features
        whole((f_in, HPAD)), whole((1, HPAD)),              # W1, b1
        whole((HPAD, HPAD)), whole((1, HPAD)),              # W2, b2
        whole((HPAD, CPAD)), whole((G, CPAD)), whole((1, CPAD)),  # Wf_pool, Wf_gf, bf
    ]
    out_spec = pl.BlockSpec((B, CPAD), lambda l, i: (0, 0))

    # Explicit VMEM budget: double-buffered input blocks + resident scratch + margin.
    a_block_bytes = (N * N if a_resident else row_tile * N) * _BF16
    vmem_needed = (
        2 * a_block_bytes
        + 2 * B * row_tile * _F32
        + 2 * N * f_in * _BF16
        + 2 * (f_in * HPAD + HPAD * HPAD) * _BF16
        + 2 * (2 * HPAD + HPAD * CPAD + G * CPAD + CPAD + B * G + B * CPAD) * _F32
        + 2 * N * HPAD * _BF16          # proj1 + proj2 scratch (bf16)
        + B * HPAD * _F32               # pooled accumulator
    )
    vmem_limit = int(min(max(1.25 * vmem_needed + (2 << 20), 16 * 2**20), 127 * 2**20))

    a_reads = 1 if a_resident else 2
    cost = pl.CostEstimate(
        flops=int(2 * (2 * N * N * HPAD)                    # two A @ proj passes
                  + 2 * N * f_in * HPAD + 2 * N * HPAD * HPAD
                  + 2 * N * B * HPAD + 2 * B * (HPAD + G) * CPAD),
        transcendentals=int(B * CPAD),
        bytes_accessed=int(a_reads * N * N * _BF16 + N * f_in * _BF16
                           + 2 * B * N * _F32 + B * CPAD * _F32),
    )

    out_padded = pl.pallas_call(
        functools.partial(gcn_kernel, num_classes=num_classes,
                          row_tile=row_tile, a_resident=a_resident),
        out_shape=jax.ShapeDtypeStruct((B, CPAD), jnp.float32),
        grid=(2, n_tiles),                                  # (layer, A-row-tile)
        in_specs=in_specs,
        out_specs=out_spec,
        scratch_shapes=[
            pltpu.VMEM((N, HPAD), jnp.bfloat16),   # proj1 = X @ W1
            pltpu.VMEM((N, HPAD), jnp.bfloat16),   # proj2 = relu(A@proj1+b1) @ W2
            pltpu.VMEM((B, HPAD), jnp.float32),    # pooled accumulator
        ],
        compiler_params=pltpu.CompilerParams(
            dimension_semantics=("arbitrary", "arbitrary"),
            vmem_limit_bytes=vmem_limit),
        cost_estimate=cost,
    )(x16, a16, pool, graph_feats, w1p, b1p, w2p, b2p, wfp, wfg, bfp)

    return out_padded[:, :num_classes]


# ----------------------------------------------------------------------------- glue
def build_norm_adj(edge_index, num_nodes):
    """A_hat = D^-1/2 (A + I) D^-1/2 with scatter-add (duplicate edges sum), PyG-style."""
    src, dst = edge_index[0], edge_index[1]
    adj = jnp.zeros((num_nodes, num_nodes), jnp.float32).at[dst, src].add(1.0)
    adj = adj + jnp.eye(num_nodes, dtype=jnp.float32)
    deg = jnp.sum(adj, axis=1)
    dinv = jnp.where(deg > 0, 1.0 / jnp.sqrt(deg), 0.0)
    return dinv[:, None] * adj * dinv[None, :]


def build_pool_matrix(batch, num_graphs):
    """pool[b, n] = 1/count_b if batch[n] == b else 0  (global mean pool)."""
    one_hot = (batch[None, :] == jnp.arange(num_graphs)[:, None]).astype(jnp.float32)
    counts = jnp.clip(jnp.sum(one_hot, axis=1, keepdims=True), 1.0, None)
    return one_hot / counts


def reference_forward(x, a_hat, pool, gf, w1, b1, w2, b2, wf, bf,
                      mxu_dtype=jnp.float32):
    """Pure-JAX reference; mxu_dtype mirrors the kernel's MXU-operand precision."""
    a = a_hat.astype(mxu_dtype)
    p1 = jnp.dot(x.astype(mxu_dtype), w1.astype(mxu_dtype),
                 preferred_element_type=jnp.float32).astype(mxu_dtype)
    h1 = jnp.maximum(jnp.dot(a, p1, preferred_element_type=jnp.float32) + b1, 0.0)
    p2 = jnp.dot(h1.astype(mxu_dtype), w2.astype(mxu_dtype),
                 preferred_element_type=jnp.float32).astype(mxu_dtype)
    h2 = jnp.maximum(jnp.dot(a, p2, preferred_element_type=jnp.float32) + b2, 0.0)
    pooled = jnp.dot(pool, h2)
    hid2 = w2.shape[1]
    z = jnp.dot(pooled, wf[:hid2]) + jnp.dot(gf, wf[hid2:]) + bf
    return jax.nn.log_softmax(z, axis=1)


# ----------------------------------------------------------------------------- demo
if __name__ == "__main__":
    N = 256         # total nodes across the batch (2 row tiles of 128)
    F_IN = 4        # next(get_num_node_features())
    HID1, HID2 = 16, 32
    B = 2           # graphs in the batch
    G = 3           # num_graph_features
    C = 5           # num_classes
    E = 1024        # directed edges

    key = jax.random.PRNGKey(0)
    keys = jax.random.split(key, 10)

    x = jax.random.normal(keys[0], (N, F_IN), jnp.float32)
    src = jax.random.randint(keys[1], (E,), 0, N)
    dst = jax.random.randint(keys[2], (E,), 0, N)
    edge_index = jnp.stack([src, dst]).astype(jnp.int32)
    batch = jnp.concatenate([jnp.zeros(N // 2, jnp.int32),
                             jnp.ones(N - N // 2, jnp.int32)])
    graph_feats = jax.random.normal(keys[3], (B, G), jnp.float32)

    # Deterministic synthetic parameters (GCNConv weights + Linear, bias).
    w1 = jax.random.normal(keys[4], (F_IN, HID1), jnp.float32) * 0.3
    b1 = jax.random.normal(keys[5], (HID1,), jnp.float32) * 0.1
    w2 = jax.random.normal(keys[6], (HID1, HID2), jnp.float32) * 0.2
    b2 = jax.random.normal(keys[7], (HID2,), jnp.float32) * 0.1
    wf = jax.random.normal(keys[8], (HID2 + G, C), jnp.float32) * 0.2
    bf = jax.random.normal(keys[9], (C,), jnp.float32) * 0.1

    a_hat = build_norm_adj(edge_index, N)
    pool = build_pool_matrix(batch, B)

    # Exercise both A paths: streamed row tiles and VMEM-resident A.
    out_stream = gcn_forward(x, a_hat, pool, graph_feats, w1, b1, w2, b2, wf, bf,
                             num_classes=C, row_tile=128, a_resident=False)
    out_res = gcn_forward(x, a_hat, pool, graph_feats, w1, b1, w2, b2, wf, bf,
                          num_classes=C, row_tile=128, a_resident=True)
    out_stream, out_res = jax.block_until_ready((out_stream, out_res))

    ref_bf16 = reference_forward(x, a_hat, pool, graph_feats, w1, b1, w2, b2,
                                 wf, bf, mxu_dtype=jnp.bfloat16)
    ref_f32 = reference_forward(x, a_hat, pool, graph_feats, w1, b1, w2, b2,
                                wf, bf, mxu_dtype=jnp.float32)

    for out in (out_stream, out_res):
        assert out.shape == (B, C)
        assert bool(jnp.isfinite(out).all())
        err_mirror = float(jnp.max(jnp.abs(out - ref_bf16)))
        assert err_mirror < 2e-3, f"mismatch vs precision-matched reference: {err_mirror}"

    err_paths = float(jnp.max(jnp.abs(out_stream - out_res)))
    assert err_paths < 1e-5, f"streamed vs resident A mismatch: {err_paths}"
    err_f32 = float(jnp.max(jnp.abs(out_res - ref_f32)))
    assert err_f32 < 8e-2, f"mismatch vs f32 reference: {err_f32}"

    print("KERNEL_OK")
</pallas_src>

<mosaic_0001>
module attributes {stable_mosaic.version = 11 : i64} {
  func.func @gcn_kernel(%arg0: i32, %arg1: i32, %arg2: memref<256x4xbf16, #tpu.memory_space<vmem>>, %arg3: memref<128x256xbf16, #tpu.memory_space<vmem>>, %arg4: memref<2x128xf32, #tpu.memory_space<vmem>>, %arg5: memref<2x3xf32, #tpu.memory_space<vmem>>, %arg6: memref<4x128xbf16, #tpu.memory_space<vmem>>, %arg7: memref<1x128xf32, #tpu.memory_space<vmem>>, %arg8: memref<128x128xbf16, #tpu.memory_space<vmem>>, %arg9: memref<1x128xf32, #tpu.memory_space<vmem>>, %arg10: memref<128x128xf32, #tpu.memory_space<vmem>>, %arg11: memref<3x128xf32, #tpu.memory_space<vmem>>, %arg12: memref<1x128xf32, #tpu.memory_space<vmem>>, %arg13: memref<2x128xf32, #tpu.memory_space<vmem>>, %arg14: memref<256x128xbf16, #tpu.memory_space<vmem>>, %arg15: memref<256x128xbf16, #tpu.memory_space<vmem>>, %arg16: memref<2x128xf32, #tpu.memory_space<vmem>>) attributes {dimension_semantics = [#tpu.dimension_semantics<arbitrary>, #tpu.dimension_semantics<arbitrary>], iteration_bounds = array<i64: 2, 2>, scalar_prefetch = 0 : i64, scratch_operands = 3 : i64, tpu.core_type = #tpu.core_type<tc>, window_params = [{pipeline_mode = #tpu.pipeline_mode<synchronous>, transform_indices = @transform_0, window_bounds = array<i64: 256, 4>}, {transform_indices = @transform_1, window_bounds = array<i64: 128, 256>}, {transform_indices = @transform_2, window_bounds = array<i64: 2, 128>}, {pipeline_mode = #tpu.pipeline_mode<synchronous>, transform_indices = @transform_3, window_bounds = array<i64: 2, 3>}, {pipeline_mode = #tpu.pipeline_mode<synchronous>, transform_indices = @transform_4, window_bounds = array<i64: 4, 128>}, {pipeline_mode = #tpu.pipeline_mode<synchronous>, transform_indices = @transform_5, window_bounds = array<i64: 1, 128>}, {pipeline_mode = #tpu.pipeline_mode<synchronous>, transform_indices = @transform_6, window_bounds = array<i64: 128, 128>}, {pipeline_mode = #tpu.pipeline_mode<synchronous>, transform_indices = @transform_7, window_bounds = array<i64: 1, 128>}, {pipeline_mode = #tpu.pipeline_mode<synchronous>, transform_indices = @transform_8, window_bounds = array<i64: 128, 128>}, {pipeline_mode = #tpu.pipeline_mode<synchronous>, transform_indices = @transform_9, window_bounds = array<i64: 3, 128>}, {pipeline_mode = #tpu.pipeline_mode<synchronous>, transform_indices = @transform_10, window_bounds = array<i64: 1, 128>}, {pipeline_mode = #tpu.pipeline_mode<synchronous>, transform_indices = @transform_11, window_bounds = array<i64: 2, 128>}]} {
    %c0_i32 = arith.constant 0 : i32
    %0 = arith.cmpi eq, %arg0, %c0_i32 : i32
    %c0_i32_0 = arith.constant 0 : i32
    %1 = arith.cmpi eq, %arg1, %c0_i32_0 : i32
    %2 = arith.andi %0, %1 : i1
    %3 = arith.extui %2 : i1 to i32
    %c0_i32_1 = arith.constant 0 : i32
    %4 = arith.cmpi ne, %3, %c0_i32_1 : i32
    scf.if %4 {
      %c0_9 = arith.constant 0 : index
      %c0_10 = arith.constant 0 : index
      %19 = vector.load %arg2[%c0_9, %c0_10] : memref<256x4xbf16, #tpu.memory_space<vmem>>, vector<256x4xbf16>
      %c0_11 = arith.constant 0 : index
      %c0_12 = arith.constant 0 : index
      %20 = vector.load %arg6[%c0_11, %c0_12] : memref<4x128xbf16, #tpu.memory_space<vmem>>, vector<4x128xbf16>
      %cst = arith.constant dense<0.000000e+00> : vector<256x128xf32>
      %21 = tpu.matmul %19, %20, %cst {dimension_numbers = #tpu.dot_dimension_numbers<[1], [0], [0], [1], [0, 0, 1, 1], [], []>} : vector<256x4xbf16>, vector<4x128xbf16>, vector<256x128xf32> -> vector<256x128xf32>
      %22 = arith.truncf %21 : vector<256x128xf32> to vector<256x128xbf16>
      %c0_13 = arith.constant 0 : index
      %c0_14 = arith.constant 0 : index
      %23 = vector.load %arg14[%c0_13, %c0_14] : memref<256x128xbf16, #tpu.memory_space<vmem>>, vector<256x128xbf16>
      tpu.vector_store %arg14[%c0_13, %c0_14], %22 {strides = array<i32>} : memref<256x128xbf16, #tpu.memory_space<vmem>>, vector<256x128xbf16>,
      %cst_15 = arith.constant 0.000000e+00 : f32
      %24 = vector.broadcast %cst_15 : f32 to vector<2x128xf32>
      %c0_16 = arith.constant 0 : index
      %c0_17 = arith.constant 0 : index
      %25 = vector.load %arg16[%c0_16, %c0_17] : memref<2x128xf32, #tpu.memory_space<vmem>>, vector<2x128xf32>
      tpu.vector_store %arg16[%c0_16, %c0_17], %24 {strides = array<i32>} : memref<2x128xf32, #tpu.memory_space<vmem>>, vector<2x128xf32>,
    } else {
    }
    %c128_i32 = arith.constant 128 : i32
    %5 = arith.muli %arg1, %c128_i32 : i32
    %6 = tpu.assume_multiple %5, 128 : i32
    %c0 = arith.constant 0 : index
    %c0_2 = arith.constant 0 : index
    %7 = vector.load %arg3[%c0, %c0_2] : memref<128x256xbf16, #tpu.memory_space<vmem>>, vector<128x256xbf16>
    %c0_i32_3 = arith.constant 0 : i32
    %8 = arith.cmpi eq, %arg0, %c0_i32_3 : i32
    %9 = arith.extui %8 : i1 to i32
    %c0_i32_4 = arith.constant 0 : i32
    %10 = arith.cmpi ne, %9, %c0_i32_4 : i32
    scf.if %10 {
      %c0_9 = arith.constant 0 : index
      %c0_10 = arith.constant 0 : index
      %19 = vector.load %arg14[%c0_9, %c0_10] : memref<256x128xbf16, #tpu.memory_space<vmem>>, vector<256x128xbf16>
      %cst = arith.constant dense<0.000000e+00> : vector<128x128xf32>
      %20 = tpu.matmul %7, %19, %cst {dimension_numbers = #tpu.dot_dimension_numbers<[1], [0], [0], [1], [0, 0, 1, 1], [], []>} : vector<128x256xbf16>, vector<256x128xbf16>, vector<128x128xf32> -> vector<128x128xf32>
      %c0_11 = arith.constant 0 : index
      %c0_12 = arith.constant 0 : index
      %21 = vector.load %arg7[%c0_11, %c0_12] : memref<1x128xf32, #tpu.memory_space<vmem>>, vector<1x128xf32>
      %22 = vector.broadcast %21 : vector<1x128xf32> to vector<128x128xf32>
      %23 = arith.addf %20, %22 : vector<128x128xf32>
      %cst_13 = arith.constant 0.000000e+00 : f32
      %24 = vector.broadcast %cst_13 : f32 to vector<128x128xf32>
      %25 = arith.maximumf %23, %24 : vector<128x128xf32>
      %26 = arith.truncf %25 : vector<128x128xf32> to vector<128x128xbf16>
      %c0_14 = arith.constant 0 : index
      %c0_15 = arith.constant 0 : index
      %27 = vector.load %arg8[%c0_14, %c0_15] : memref<128x128xbf16, #tpu.memory_space<vmem>>, vector<128x128xbf16>
      %cst_16 = arith.constant dense<0.000000e+00> : vector<128x128xf32>
      %28 = tpu.matmul %26, %27, %cst_16 {dimension_numbers = #tpu.dot_dimension_numbers<[1], [0], [0], [1], [0, 0, 1, 1], [], []>} : vector<128x128xbf16>, vector<128x128xbf16>, vector<128x128xf32> -> vector<128x128xf32>
      %29 = arith.truncf %28 : vector<128x128xf32> to vector<128x128xbf16>
      %30 = arith.index_cast %6 : i32 to index
      %c0_17 = arith.constant 0 : index
      %31 = vector.load %arg15[%30, %c0_17] : memref<256x128xbf16, #tpu.memory_space<vmem>>, vector<128x128xbf16>
      tpu.vector_store %arg15[%30, %c0_17], %29 {strides = array<i32>} : memref<256x128xbf16, #tpu.memory_space<vmem>>, vector<128x128xbf16>,
    } else {
    }
    %c1_i32 = arith.constant 1 : i32
    %11 = arith.cmpi eq, %arg0, %c1_i32 : i32
    %12 = arith.extui %11 : i1 to i32
    %c0_i32_5 = arith.constant 0 : i32
    %13 = arith.cmpi ne, %12, %c0_i32_5 : i32
    scf.if %13 {
      %c0_9 = arith.constant 0 : index
      %c0_10 = arith.constant 0 : index
      %19 = vector.load %arg15[%c0_9, %c0_10] : memref<256x128xbf16, #tpu.memory_space<vmem>>, vector<256x128xbf16>
      %cst = arith.constant dense<0.000000e+00> : vector<128x128xf32>
      %20 = tpu.matmul %7, %19, %cst {dimension_numbers = #tpu.dot_dimension_numbers<[1], [0], [0], [1], [0, 0, 1, 1], [], []>} : vector<128x256xbf16>, vector<256x128xbf16>, vector<128x128xf32> -> vector<128x128xf32>
      %c0_11 = arith.constant 0 : index
      %c0_12 = arith.constant 0 : index
      %21 = vector.load %arg9[%c0_11, %c0_12] : memref<1x128xf32, #tpu.memory_space<vmem>>, vector<1x128xf32>
      %22 = vector.broadcast %21 : vector<1x128xf32> to vector<128x128xf32>
      %23 = arith.addf %20, %22 : vector<128x128xf32>
      %cst_13 = arith.constant 0.000000e+00 : f32
      %24 = vector.broadcast %cst_13 : f32 to vector<128x128xf32>
      %25 = arith.maximumf %23, %24 : vector<128x128xf32>
      %c0_14 = arith.constant 0 : index
      %c0_15 = arith.constant 0 : index
      %26 = vector.load %arg16[%c0_14, %c0_15] : memref<2x128xf32, #tpu.memory_space<vmem>>, vector<2x128xf32>
      %c0_16 = arith.constant 0 : index
      %c0_17 = arith.constant 0 : index
      %27 = vector.load %arg4[%c0_16, %c0_17] : memref<2x128xf32, #tpu.memory_space<vmem>>, vector<2x128xf32>
      %cst_18 = arith.constant dense<0.000000e+00> : vector<2x128xf32>
      %28 = tpu.matmul %27, %25, %cst_18 {dimension_numbers = #tpu.dot_dimension_numbers<[1], [0], [0], [1], [0, 0, 1, 1], [], []>} : vector<2x128xf32>, vector<128x128xf32>, vector<2x128xf32> -> vector<2x128xf32>
      %29 = arith.addf %26, %28 : vector<2x128xf32>
      %c0_19 = arith.constant 0 : index
      %c0_20 = arith.constant 0 : index
      %30 = vector.load %arg16[%c0_19, %c0_20] : memref<2x128xf32, #tpu.memory_space<vmem>>, vector<2x128xf32>
      tpu.vector_store %arg16[%c0_19, %c0_20], %29 {strides = array<i32>} : memref<2x128xf32, #tpu.memory_space<vmem>>, vector<2x128xf32>,
    } else {
    }
    %c1_i32_6 = arith.constant 1 : i32
    %14 = arith.cmpi eq, %arg0, %c1_i32_6 : i32
    %c1_i32_7 = arith.constant 1 : i32
    %15 = arith.cmpi eq, %arg1, %c1_i32_7 : i32
    %16 = arith.andi %14, %15 : i1
    %17 = arith.extui %16 : i1 to i32
    %c0_i32_8 = arith.constant 0 : i32
    %18 = arith.cmpi ne, %17, %c0_i32_8 : i32
    scf.if %18 {
      %c0_9 = arith.constant 0 : index
      %c0_10 = arith.constant 0 : index
      %19 = vector.load %arg16[%c0_9, %c0_10] : memref<2x128xf32, #tpu.memory_space<vmem>>, vector<2x128xf32>
      %c0_11 = arith.constant 0 : index
      %c0_12 = arith.constant 0 : index
      %20 = vector.load %arg10[%c0_11, %c0_12] : memref<128x128xf32, #tpu.memory_space<vmem>>, vector<128x128xf32>
      %cst = arith.constant dense<0.000000e+00> : vector<2x128xf32>
      %21 = tpu.matmul %19, %20, %cst {dimension_numbers = #tpu.dot_dimension_numbers<[1], [0], [0], [1], [0, 0, 1, 1], [], []>} : vector<2x128xf32>, vector<128x128xf32>, vector<2x128xf32> -> vector<2x128xf32>
      %c0_13 = arith.constant 0 : index
      %c0_14 = arith.constant 0 : index
      %22 = vector.load %arg5[%c0_13, %c0_14] : memref<2x3xf32, #tpu.memory_space<vmem>>, vector<2x3xf32>
      %c0_15 = arith.constant 0 : index
      %c0_16 = arith.constant 0 : index
      %23 = vector.load %arg11[%c0_15, %c0_16] : memref<3x128xf32, #tpu.memory_space<vmem>>, vector<3x128xf32>
      %cst_17 = arith.constant dense<0.000000e+00> : vector<2x128xf32>
      %24 = tpu.matmul %22, %23, %cst_17 {dimension_numbers = #tpu.dot_dimension_numbers<[1], [0], [0], [1], [0, 0, 1, 1], [], []>} : vector<2x3xf32>, vector<3x128xf32>, vector<2x128xf32> -> vector<2x128xf32>
      %25 = arith.addf %21, %24 : vector<2x128xf32>
      %c0_18 = arith.constant 0 : index
      %c0_19 = arith.constant 0 : index
      %26 = vector.load %arg12[%c0_18, %c0_19] : memref<1x128xf32, #tpu.memory_space<vmem>>, vector<1x128xf32>
      %27 = vector.broadcast %26 : vector<1x128xf32> to vector<2x128xf32>
      %28 = arith.addf %25, %27 : vector<2x128xf32>
      %29 = tpu.iota {dimensions = array<i32: 1>} : vector<2x128xi32>
      %c5_i32 = arith.constant 5 : i32
      %30 = vector.broadcast %c5_i32 : i32 to vector<2x128xi32>
      %31 = arith.cmpi slt, %29, %30 : vector<2x128xi32>
      %cst_20 = arith.constant 0xFF800000 : f32
      %32 = vector.broadcast %cst_20 : f32 to vector<2x128xf32>
      %33 = arith.select %31, %28, %32 : vector<2x128xi1>, vector<2x128xf32>
      %cst_21 = arith.constant dense<0xFF800000> : vector<2xf32>
      %34 = vector.multi_reduction <maximumf>, %33, %cst_21 [1] : vector<2x128xf32> to vector<2xf32>
      %35 = vector.shape_cast %34 : vector<2xf32> to vector<2x1xf32>
      %36 = vector.broadcast %35 : vector<2x1xf32> to vector<2x128xf32>
      %37 = arith.subf %33, %36 : vector<2x128xf32>
      %38 = math.exp %37 : vector<2x128xf32>
      %cst_22 = arith.constant dense<0.000000e+00> : vector<2xf32>
      %39 = vector.multi_reduction <add>, %38, %cst_22 [1] : vector<2x128xf32> to vector<2xf32>
      %40 = vector.shape_cast %39 : vector<2xf32> to vector<2x1xf32>
      %41 = math.log %40 : vector<2x1xf32>
      %42 = arith.addf %41, %35 : vector<2x1xf32>
      %43 = vector.broadcast %42 : vector<2x1xf32> to vector<2x128xf32>
      %44 = arith.subf %33, %43 : vector<2x128xf32>
      %c0_23 = arith.constant 0 : index
      %c0_24 = arith.constant 0 : index
      %45 = vector.load %arg13[%c0_23, %c0_24] : memref<2x128xf32, #tpu.memory_space<vmem>>, vector<2x128xf32>
      tpu.vector_store %arg13[%c0_23, %c0_24], %44 {strides = array<i32>} : memref<2x128xf32, #tpu.memory_space<vmem>>, vector<2x128xf32>,
    } else {
    }
    return
  }
  func.func @transform_0(%arg0: i32, %arg1: i32) -> (i32, i32) {
    %c0_i32 = arith.constant 0 : i32
    %c0_i32_0 = arith.constant 0 : i32
    %c0_i32_1 = arith.constant 0 : i32
    return %c0_i32, %c0_i32_0 : i32, i32
  }
  func.func @transform_1(%arg0: i32, %arg1: i32) -> (i32, i32) {
    %c0_i32 = arith.constant 0 : i32
    %c0_i32_0 = arith.constant 0 : i32
    return %arg1, %c0_i32 : i32, i32
  }
  func.func @transform_2(%arg0: i32, %arg1: i32) -> (i32, i32) {
    %c0_i32 = arith.constant 0 : i32
    %c0_i32_0 = arith.constant 0 : i32
    return %c0_i32, %arg1 : i32, i32
  }
  func.func @transform_3(%arg0: i32, %arg1: i32) -> (i32, i32) {
    %c0_i32 = arith.constant 0 : i32
    %c0_i32_0 = arith.constant 0 : i32
    %c0_i32_1 = arith.constant 0 : i32
    return %c0_i32, %c0_i32_0 : i32, i32
  }
  func.func @transform_4(%arg0: i32, %arg1: i32) -> (i32, i32) {
    %c0_i32 = arith.constant 0 : i32
    %c0_i32_0 = arith.constant 0 : i32
    %c0_i32_1 = arith.constant 0 : i32
    return %c0_i32, %c0_i32_0 : i32, i32
  }
  func.func @transform_5(%arg0: i32, %arg1: i32) -> (i32, i32) {
    %c0_i32 = arith.constant 0 : i32
    %c0_i32_0 = arith.constant 0 : i32
    %c0_i32_1 = arith.constant 0 : i32
    return %c0_i32, %c0_i32_0 : i32, i32
  }
  func.func @transform_6(%arg0: i32, %arg1: i32) -> (i32, i32) {
    %c0_i32 = arith.constant 0 : i32
    %c0_i32_0 = arith.constant 0 : i32
    %c0_i32_1 = arith.constant 0 : i32
    return %c0_i32, %c0_i32_0 : i32, i32
  }
  func.func @transform_7(%arg0: i32, %arg1: i32) -> (i32, i32) {
    %c0_i32 = arith.constant 0 : i32
    %c0_i32_0 = arith.constant 0 : i32
    %c0_i32_1 = arith.constant 0 : i32
    return %c0_i32, %c0_i32_0 : i32, i32
  }
  func.func @transform_8(%arg0: i32, %arg1: i32) -> (i32, i32) {
    %c0_i32 = arith.constant 0 : i32
    %c0_i32_0 = arith.constant 0 : i32
    %c0_i32_1 = arith.constant 0 : i32
    return %c0_i32, %c0_i32_0 : i32, i32
  }
  func.func @transform_9(%arg0: i32, %arg1: i32) -> (i32, i32) {
    %c0_i32 = arith.constant 0 : i32
    %c0_i32_0 = arith.constant 0 : i32
    %c0_i32_1 = arith.constant 0 : i32
    return %c0_i32, %c0_i32_0 : i32, i32
  }
  func.func @transform_10(%arg0: i32, %arg1: i32) -> (i32, i32) {
    %c0_i32 = arith.constant 0 : i32
    %c0_i32_0 = arith.constant 0 : i32
    %c0_i32_1 = arith.constant 0 : i32
    return %c0_i32, %c0_i32_0 : i32, i32
  }
  func.func @transform_11(%arg0: i32, %arg1: i32) -> (i32, i32) {
    %c0_i32 = arith.constant 0 : i32
    %c0_i32_0 = arith.constant 0 : i32
    %c0_i32_1 = arith.constant 0 : i32
    return %c0_i32, %c0_i32_0 : i32, i32
  }
}

</mosaic_0001>

<llo_original>
// kernel: gcn_forward.1
$region0: #{gcn_forward.1}
  #allocation0 [shape = 'u32[]', space=smem, size = 0x4, offset = 0x4, fixed_abs, tag = 'smem constant byte address 0x4 - core index']
  #allocation1 [shape = 'u32[72,128]{1,0:T(1,128)}', space=vmem, size = 0x9000, scoped, tag = 'internal scratch']
  #allocation2 [shape = 'bf16[256,128]{1,0:T(8,128)(2,1)}', space=vmem, size = 0x10000, scoped, tag = 'scratch operand']
  #allocation3 [shape = 'bf16[256,128]{1,0:T(8,128)(2,1)}', space=vmem, size = 0x10000, scoped, tag = 'scratch operand']
  #allocation4 [shape = 'f32[2,128]{1,0:T(2,128)}', space=vmem, size = 0x400, scoped, tag = 'scratch operand']
  %s0 = inlined_call_operand.vmem [shape: bf16[256,4], index: 0, kind: input, shape index: {}]
  %s1 = inlined_call_operand.vmem [shape: bf16[256,256], index: 1, kind: input, shape index: {}]
  %s2 = inlined_call_operand.vmem [shape: f32[2,256], index: 2, kind: input, shape index: {}]
  %s3 = inlined_call_operand.vmem [shape: f32[2,3], index: 3, kind: input, shape index: {}]
  %s4 = inlined_call_operand.vmem [shape: bf16[4,128], index: 4, kind: input, shape index: {}]
  %s5 = inlined_call_operand.vmem [shape: f32[1,128], index: 5, kind: input, shape index: {}]
  %s6 = inlined_call_operand.vmem [shape: bf16[128,128], index: 6, kind: input, shape index: {}]
  %s7 = inlined_call_operand.vmem [shape: f32[1,128], index: 7, kind: input, shape index: {}]
  %s8 = inlined_call_operand.vmem [shape: f32[128,128], index: 8, kind: input, shape index: {}]
  %s9 = inlined_call_operand.vmem [shape: f32[3,128], index: 9, kind: input, shape index: {}]
  %s10 = inlined_call_operand.vmem [shape: f32[1,128], index: 10, kind: input, shape index: {}]
  %s11 = inlined_call_operand.hbm [shape: f32[2,128], index: 11, kind: output, shape index: {}]
  %s12 = sld [smem:[#allocation0]]
  $region93: #{gcn_forward.1} parent=0
    _
  %s14 = ssub.s32 1, %s12
  %s15 = scalar_select 0, %s14, %s12
  $region1: #{gcn_forward.1} parent=0
    #allocation5 [shape = 'u8[1024]{0}', space=vmem, size = 0x400, scoped, tag = 'output window, operand 0, single buffered']
    #allocation6 [shape = 's32[2]{0}', space=sflag, size = 0x8, scoped, tag = 'scoped memory for gcn_forward.1']
    %16 = vsyncpa [#allocation6], 0
    loop: start=0, step=1, limit=6
    $region2: #{gcn_forward.1} parent=1 // loop_pre_header
      _
    $region3: #{gcn_forward.1} parent=1 // loop_header
      %s18 = sphi 0, %s22
      %p19 = scmp.ge.s32.totalorder %s18, 6
      %s25 = sphi 0, %s37
      %s26 = sphi 0, %s33
      %s27 = sphi 0, %s25
      %s28 = sphi 0, %s26
      %s29 = sphi 0, %s27
      %s30 = sphi 0, %s28
      %s38 = sphi 0, %s38
      %s40 = sphi 0, %s38
      %s41 = sphi 0, %s40
      %s55 = sphi 0, %s41
      %s61 = sphi 0, %s63
      %s64 = sphi 0, %s61
      %s65 = sphi 0, %s64
      %s81 = sphi 0, %s65
      %s87 = sphi 0, %s89
      %s90 = sphi 0, %s87
      %s91 = sphi 0, %s90
      %s107 = sphi 0, %s91
      %s111 = sphi 0, %s111
      %s113 = sphi 0, %s111
      %s114 = sphi 0, %s113
      %s128 = sphi 0, %s114
      %s132 = sphi 0, %s132
      %s134 = sphi 0, %s132
      %s135 = sphi 0, %s134
      %s149 = sphi 0, %s135
      %s153 = sphi 0, %s153
      %s155 = sphi 0, %s153
      %s156 = sphi 0, %s155
      %s170 = sphi 0, %s156
      %s174 = sphi 0, %s174
      %s176 = sphi 0, %s174
      %s177 = sphi 0, %s176
      %s191 = sphi 0, %s177
      %s195 = sphi 0, %s195
      %s197 = sphi 0, %s195
      %s198 = sphi 0, %s197
      %s212 = sphi 0, %s198
      %s216 = sphi 0, %s216
      %s218 = sphi 0, %s216
      %s219 = sphi 0, %s218
      %s233 = sphi 0, %s219
      %s237 = sphi 0, %s237
      %s239 = sphi 0, %s237
      %s240 = sphi 0, %s239
      %s254 = sphi 0, %s240
      %s258 = sphi 0, %s258
      %s260 = sphi 0, %s258
      %s261 = sphi 0, %s260
      %s275 = sphi 0, %s261
      %s279 = sphi 0, %s279
      %s281 = sphi 0, %s279
      %s282 = sphi 0, %s281
      %s296 = sphi 0, %s282
    $region4: #{gcn_forward.1} parent=1 // loop_header_branch
      %21 = sbr.rel (%p19) target = $region8
    $region5: #{gcn_forward.1} parent=1 // loop_body
      %s23 = ssub.s32 %s18, 1
      %s24 = ssub.s32 %s18, 2
      %s31 = sadd.s32 1, %s26
      %p32 = scmp.ge.s32.totalorder %s31, 2
      %s33 = scalar_select %p32, 0, %s31
      %s34 = sadd.s32 1, %s25
      %s35 = scalar_select %p32, %s34, %s25
      %p36 = scmp.ge.s32.totalorder %s35, 2
      %s37 = scalar_select %p36, 0, %s35
      %s39 = sadd.s32 %s38, 1
      %p42 = scmp.eq.s32.totalorder %s18, 3
      %p43 = scmp.ne.s32.totalorder %s38, %s40
      %p44 = scmp.eq.s32.totalorder %s18, 0
      %p45 = por %p43, %p44
      %p46 = scmp.ne.s32.totalorder %s38, %s40
      %p47 = scmp.eq.s32.totalorder %s23, 3
      %p48 = por %p46, %p47
      %p49 = scmp.ne.s32.totalorder %s40, %s41
      %p50 = scmp.eq.s32.totalorder %s23, 0
      %p51 = por %p49, %p50
      %p52 = scmp.ne.s32.totalorder %s40, %s41
      %p53 = scmp.eq.s32.totalorder %s24, 3
      %p54 = por %p52, %p53
      %p56 = scmp.ne.s32.totalorder %s41, %s55
      %p57 = scmp.eq.s32.totalorder %s24, 0
      %p58 = por %p56, %p57
      %s59 = ssub.s32 %s26, %s33
      %p60 = scmp.eq.s32.totalorder %s59, 0
      %s62 = sadd.s32 %s61, 1
      %s63 = scalar_select %p60, %s61, %s62
      %p66 = pneg %p60
      %p67 = scmp.eq.s32.totalorder %s18, 3
      %p68 = por %p66, %p67
      %p69 = scmp.ne.s32.totalorder %s61, %s64
      %p70 = scmp.eq.s32.totalorder %s18, 0
      %p71 = por %p69, %p70
      %p72 = scmp.ne.s32.totalorder %s61, %s64
      %p73 = scmp.eq.s32.totalorder %s23, 3
      %p74 = por %p72, %p73
      %p75 = scmp.ne.s32.totalorder %s64, %s65
      %p76 = scmp.eq.s32.totalorder %s23, 0
      %p77 = por %p75, %p76
      %p78 = scmp.ne.s32.totalorder %s64, %s65
      %p79 = scmp.eq.s32.totalorder %s24, 3
      %p80 = por %p78, %p79
      %p82 = scmp.ne.s32.totalorder %s65, %s81
      %p83 = scmp.eq.s32.totalorder %s24, 0
      %p84 = por %p82, %p83
      %s85 = ssub.s32 %s26, %s33
      %p86 = scmp.eq.s32.totalorder %s85, 0
      %s88 = sadd.s32 %s87, 1
      %s89 = scalar_select %p86, %s87, %s88
      %p92 = pneg %p86
      %p93 = scmp.eq.s32.totalorder %s18, 3
      %p94 = por %p92, %p93
      %p95 = scmp.ne.s32.totalorder %s87, %s90
      %p96 = scmp.eq.s32.totalorder %s18, 0
      %p97 = por %p95, %p96
      %p98 = scmp.ne.s32.totalorder %s87, %s90
      %p99 = scmp.eq.s32.totalorder %s23, 3
      %p100 = por %p98, %p99
      %p101 = scmp.ne.s32.totalorder %s90, %s91
      %p102 = scmp.eq.s32.totalorder %s23, 0
      %p103 = por %p101, %p102
      %p104 = scmp.ne.s32.totalorder %s90, %s91
      %p105 = scmp.eq.s32.totalorder %s24, 3
      %p106 = por %p104, %p105
      %p108 = scmp.ne.s32.totalorder %s91, %s107
      %p109 = scmp.eq.s32.totalorder %s24, 0
      %p110 = por %p108, %p109
      %s112 = sadd.s32 %s111, 1
      %p115 = scmp.eq.s32.totalorder %s18, 3
      %p116 = scmp.ne.s32.totalorder %s111, %s113
      %p117 = scmp.eq.s32.totalorder %s18, 0
      %p118 = por %p116, %p117
      %p119 = scmp.ne.s32.totalorder %s111, %s113
      %p120 = scmp.eq.s32.totalorder %s23, 3
      %p121 = por %p119, %p120
      %p122 = scmp.ne.s32.totalorder %s113, %s114
      %p123 = scmp.eq.s32.totalorder %s23, 0
      %p124 = por %p122, %p123
      %p125 = scmp.ne.s32.totalorder %s113, %s114
      %p126 = scmp.eq.s32.totalorder %s24, 3
      %p127 = por %p125, %p126
      %p129 = scmp.ne.s32.totalorder %s114, %s128
      %p130 = scmp.eq.s32.totalorder %s24, 0
      %p131 = por %p129, %p130
      %s133 = sadd.s32 %s132, 1
      %p136 = scmp.eq.s32.totalorder %s18, 3
      %p137 = scmp.ne.s32.totalorder %s132, %s134
      %p138 = scmp.eq.s32.totalorder %s18, 0
      %p139 = por %p137, %p138
      %p140 = scmp.ne.s32.totalorder %s132, %s134
      %p141 = scmp.eq.s32.totalorder %s23, 3
      %p142 = por %p140, %p141
      %p143 = scmp.ne.s32.totalorder %s134, %s135
      %p144 = scmp.eq.s32.totalorder %s23, 0
      %p145 = por %p143, %p144
      %p146 = scmp.ne.s32.totalorder %s134, %s135
      %p147 = scmp.eq.s32.totalorder %s24, 3
      %p148 = por %p146, %p147
      %p150 = scmp.ne.s32.totalorder %s135, %s149
      %p151 = scmp.eq.s32.totalorder %s24, 0
      %p152 = por %p150, %p151
      %s154 = sadd.s32 %s153, 1
      %p157 = scmp.eq.s32.totalorder %s18, 3
      %p158 = scmp.ne.s32.totalorder %s153, %s155
      %p159 = scmp.eq.s32.totalorder %s18, 0
      %p160 = por %p158, %p159
      %p161 = scmp.ne.s32.totalorder %s153, %s155
      %p162 = scmp.eq.s32.totalorder %s23, 3
      %p163 = por %p161, %p162
      %p164 = scmp.ne.s32.totalorder %s155, %s156
      %p165 = scmp.eq.s32.totalorder %s23, 0
      %p166 = por %p164, %p165
      %p167 = scmp.ne.s32.totalorder %s155, %s156
      %p168 = scmp.eq.s32.totalorder %s24, 3
      %p169 = por %p167, %p168
      %p171 = scmp.ne.s32.totalorder %s156, %s170
      %p172 = scmp.eq.s32.totalorder %s24, 0
      %p173 = por %p171, %p172
      %s175 = sadd.s32 %s174, 1
      %p178 = scmp.eq.s32.totalorder %s18, 3
      %p179 = scmp.ne.s32.totalorder %s174, %s176
      %p180 = scmp.eq.s32.totalorder %s18, 0
      %p181 = por %p179, %p180
      %p182 = scmp.ne.s32.totalorder %s174, %s176
      %p183 = scmp.eq.s32.totalorder %s23, 3
      %p184 = por %p182, %p183
      %p185 = scmp.ne.s32.totalorder %s176, %s177
      %p186 = scmp.eq.s32.totalorder %s23, 0
      %p187 = por %p185, %p186
      %p188 = scmp.ne.s32.totalorder %s176, %s177
      %p189 = scmp.eq.s32.totalorder %s24, 3
      %p190 = por %p188, %p189
      %p192 = scmp.ne.s32.totalorder %s177, %s191
      %p193 = scmp.eq.s32.totalorder %s24, 0
      %p194 = por %p192, %p193
      %s196 = sadd.s32 %s195, 1
      %p199 = scmp.eq.s32.totalorder %s18, 3
      %p200 = scmp.ne.s32.totalorder %s195, %s197
      %p201 = scmp.eq.s32.totalorder %s18, 0
      %p202 = por %p200, %p201
      %p203 = scmp.ne.s32.totalorder %s195, %s197
      %p204 = scmp.eq.s32.totalorder %s23, 3
      %p205 = por %p203, %p204
      %p206 = scmp.ne.s32.totalorder %s197, %s198
      %p207 = scmp.eq.s32.totalorder %s23, 0
      %p208 = por %p206, %p207
      %p209 = scmp.ne.s32.totalorder %s197, %s198
      %p210 = scmp.eq.s32.totalorder %s24, 3
      %p211 = por %p209, %p210
      %p213 = scmp.ne.s32.totalorder %s198, %s212
      %p214 = scmp.eq.s32.totalorder %s24, 0
      %p215 = por %p213, %p214
      %s217 = sadd.s32 %s216, 1
      %p220 = scmp.eq.s32.totalorder %s18, 3
      %p221 = scmp.ne.s32.totalorder %s216, %s218
      %p222 = scmp.eq.s32.totalorder %s18, 0
      %p223 = por %p221, %p222
      %p224 = scmp.ne.s32.totalorder %s216, %s218
      %p225 = scmp.eq.s32.totalorder %s23, 3
      %p226 = por %p224, %p225
      %p227 = scmp.ne.s32.totalorder %s218, %s219
      %p228 = scmp.eq.s32.totalorder %s23, 0
      %p229 = por %p227, %p228
      %p230 = scmp.ne.s32.totalorder %s218, %s219
      %p231 = scmp.eq.s32.totalorder %s24, 3
      %p232 = por %p230, %p231
      %p234 = scmp.ne.s32.totalorder %s219, %s233
      %p235 = scmp.eq.s32.totalorder %s24, 0
      %p236 = por %p234, %p235
      %s238 = sadd.s32 %s237, 1
      %p241 = scmp.eq.s32.totalorder %s18, 3
      %p242 = scmp.ne.s32.totalorder %s237, %s239
      %p243 = scmp.eq.s32.totalorder %s18, 0
      %p244 = por %p242, %p243
      %p245 = scmp.ne.s32.totalorder %s237, %s239
      %p246 = scmp.eq.s32.totalorder %s23, 3
      %p247 = por %p245, %p246
      %p248 = scmp.ne.s32.totalorder %s239, %s240
      %p249 = scmp.eq.s32.totalorder %s23, 0
      %p250 = por %p248, %p249
      %p251 = scmp.ne.s32.totalorder %s239, %s240
      %p252 = scmp.eq.s32.totalorder %s24, 3
      %p253 = por %p251, %p252
      %p255 = scmp.ne.s32.totalorder %s240, %s254
      %p256 = scmp.eq.s32.totalorder %s24, 0
      %p257 = por %p255, %p256
      %s259 = sadd.s32 %s258, 1
      %p262 = scmp.eq.s32.totalorder %s18, 3
      %p263 = scmp.ne.s32.totalorder %s258, %s260
      %p264 = scmp.eq.s32.totalorder %s18, 0
      %p265 = por %p263, %p264
      %p266 = scmp.ne.s32.totalorder %s258, %s260
      %p267 = scmp.eq.s32.totalorder %s23, 3
      %p268 = por %p266, %p267
      %p269 = scmp.ne.s32.totalorder %s260, %s261
      %p270 = scmp.eq.s32.totalorder %s23, 0
      %p271 = por %p269, %p270
      %p272 = scmp.ne.s32.totalorder %s260, %s261
      %p273 = scmp.eq.s32.totalorder %s24, 3
      %p274 = por %p272, %p273
      %p276 = scmp.ne.s32.totalorder %s261, %s275
      %p277 = scmp.eq.s32.totalorder %s24, 0
      %p278 = por %p276, %p277
      %s280 = sadd.s32 %s279, 1
      %p283 = scmp.eq.s32.totalorder %s18, 3
      %p284 = scmp.ne.s32.totalorder %s279, %s281
      %p285 = scmp.eq.s32.totalorder %s18, 0
      %p286 = por %p284, %p285
      %p287 = scmp.ne.s32.totalorder %s279, %s281
      %p288 = scmp.eq.s32.totalorder %s23, 3
      %p289 = por %p287, %p288
      %p290 = scmp.ne.s32.totalorder %s281, %s282
      %p291 = scmp.eq.s32.totalorder %s23, 0
      %p292 = por %p290, %p291
      %p293 = scmp.ne.s32.totalorder %s281, %s282
      %p294 = scmp.eq.s32.totalorder %s24, 3
      %p295 = por %p293, %p294
      %p297 = scmp.ne.s32.totalorder %s282, %s296
      %p298 = scmp.eq.s32.totalorder %s24, 0
      %p299 = por %p297, %p298
      %p300 = scmp.le.s32.totalorder 1, %s18
      %p301 = scmp.lt.s32.totalorder %s18, 5
      %p302 = pnand %p300, %p301
      %p303 = pneg %p302
      // Predicated region
      $region9: #{gcn_forward.1} parent=5 // pred_check
        _
      $region10: #{gcn_forward.1} parent=5 // pred_check_branch
        %305 = sbr.rel (%p302) target = $region12
      $region11: #{gcn_forward.1} parent=5 // pred_region
        %s306 = ssub.s32 %s18, 1
        // Predicated region
        $region13: #{gcn_forward.1} parent=11 // pred_check
          %p307 = pneg %p51
        $region14: #{gcn_forward.1} parent=11 // pred_check_branch
          %309 = sbr.rel (%p307) target = $region16
        $region15: #{gcn_forward.1} parent=11 // pred_region
          _
        $region16: #{gcn_forward.1} parent=11 // pred_fallthru
          _
        // Predicated region
        $region17: #{gcn_forward.1} parent=11 // pred_check
          %p310 = pneg %p124
        $region18: #{gcn_forward.1} parent=11 // pred_check_branch
          %312 = sbr.rel (%p310) target = $region20
        $region19: #{gcn_forward.1} parent=11 // pred_region
          _
        $region20: #{gcn_forward.1} parent=11 // pred_fallthru
          _
        // Predicated region
        $region21: #{gcn_forward.1} parent=11 // pred_check
          %p313 = pneg %p145
        $region22: #{gcn_forward.1} parent=11 // pred_check_branch
          %315 = sbr.rel (%p313) target = $region24
        $region23: #{gcn_forward.1} parent=11 // pred_region
          _
        $region24: #{gcn_forward.1} parent=11 // pred_fallthru
          _
        // Predicated region
        $region25: #{gcn_forward.1} parent=11 // pred_check
          %p316 = pneg %p166
        $region26: #{gcn_forward.1} parent=11 // pred_check_branch
          %318 = sbr.rel (%p316) target = $region28
        $region27: #{gcn_forward.1} parent=11 // pred_region
          _
        $region28: #{gcn_forward.1} parent=11 // pred_fallthru
          _
        // Predicated region
        $region29: #{gcn_forward.1} parent=11 // pred_check
          %p319 = pneg %p187
        $region30: #{gcn_forward.1} parent=11 // pred_check_branch
          %321 = sbr.rel (%p319) target = $region32
        $region31: #{gcn_forward.1} parent=11 // pred_region
          _
        $region32: #{gcn_forward.1} parent=11 // pred_fallthru
          _
        // Predicated region
        $region33: #{gcn_forward.1} parent=11 // pred_check
          %p322 = pneg %p208
        $region34: #{gcn_forward.1} parent=11 // pred_check_branch
          %324 = sbr.rel (%p322) target = $region36
        $region35: #{gcn_forward.1} parent=11 // pred_region
          _
        $region36: #{gcn_forward.1} parent=11 // pred_fallthru
          _
        // Predicated region
        $region37: #{gcn_forward.1} parent=11 // pred_check
          %p325 = pneg %p229
        $region38: #{gcn_forward.1} parent=11 // pred_check_branch
          %327 = sbr.rel (%p325) target = $region40
        $region39: #{gcn_forward.1} parent=11 // pred_region
          _
        $region40: #{gcn_forward.1} parent=11 // pred_fallthru
          _
        // Predicated region
        $region41: #{gcn_forward.1} parent=11 // pred_check
          %p328 = pneg %p250
        $region42: #{gcn_forward.1} parent=11 // pred_check_branch
          %330 = sbr.rel (%p328) target = $region44
        $region43: #{gcn_forward.1} parent=11 // pred_region
          _
        $region44: #{gcn_forward.1} parent=11 // pred_fallthru
          _
        // Predicated region
        $region45: #{gcn_forward.1} parent=11 // pred_check
          %p331 = pneg %p271
        $region46: #{gcn_forward.1} parent=11 // pred_check_branch
          %333 = sbr.rel (%p331) target = $region48
        $region47: #{gcn_forward.1} parent=11 // pred_region
          _
        $region48: #{gcn_forward.1} parent=11 // pred_fallthru
          _
      $region12: #{gcn_forward.1} parent=5 // pred_fallthru
        _
      %p334 = scmp.lt.s32.totalorder %s18, 4
      // Predicated region
      $region49: #{gcn_forward.1} parent=5 // pred_check
        %p335 = pneg %p334
      $region50: #{gcn_forward.1} parent=5 // pred_check_branch
        %337 = sbr.rel (%p335) target = $region52
      $region51: #{gcn_forward.1} parent=5 // pred_region
        // Predicated region
        $region53: #{gcn_forward.1} parent=51 // pred_check
          %p338 = pneg %p71
        $region54: #{gcn_forward.1} parent=51 // pred_check_branch
          %340 = sbr.rel (%p338) target = $region56
        $region55: #{gcn_forward.1} parent=51 // pred_region
          %s341 = smul.u32 16, %s26
          %p342 = scmp.lt.s32.totalorder %s341, 31
          %s343 = scalar_select %p342, %s341, 31
          %s344 = smul.addr %s343, 2
          %s345 = smul.addr %s344, 4
          %s346 = scalar_lea.vmem %s1, %s345
          %s347 = smul.u32 16, %s26
        $region56: #{gcn_forward.1} parent=51 // pred_fallthru
          _
        // Predicated region
        $region57: #{gcn_forward.1} parent=51 // pred_check
          %p348 = pneg %p97
        $region58: #{gcn_forward.1} parent=51 // pred_check_branch
          %350 = sbr.rel (%p348) target = $region60
        $region59: #{gcn_forward.1} parent=51 // pred_region
          %p351 = scmp.lt.s32.totalorder %s26, 1
          %s352 = scalar_select %p351, %s26, 1
          %s353 = smul.addr %s352, 2
          %s354 = scalar_lea.vmem %s2, %s353
        $region60: #{gcn_forward.1} parent=51 // pred_fallthru
          _
      $region52: #{gcn_forward.1} parent=5 // pred_fallthru
        _
      %p355 = scmp.le.s32.totalorder 1, %s18
      %p356 = scmp.lt.s32.totalorder %s18, 5
      %p357 = pnand %p355, %p356
      %p358 = pneg %p357
      // Predicated region
      $region61: #{gcn_forward.1} parent=5 // pred_check
        _
      $region62: #{gcn_forward.1} parent=5 // pred_check_branch
        %360 = sbr.rel (%p357) target = $region64
      $region63: #{gcn_forward.1} parent=5 // pred_region
        %s361 = ssub.s32 %s18, 1
        %p362 = pneg %p51
        %p363 = pneg %p48
        %s364 = smul.u32 16, %s28
        %p365 = scmp.lt.s32.totalorder %s364, 31
        %s366 = scalar_select %p365, %s364, 31
        %s367 = smul.addr %s366, 2
        %s368 = smul.addr %s367, 4
        %s369 = scalar_lea.vmem %s1, %s368
        %p370 = pneg %p77
        %p371 = pneg %p74
        %p372 = scmp.lt.s32.totalorder %s28, 1
        %s373 = scalar_select %p372, %s28, 1
        %s374 = smul.addr %s373, 2
        %s375 = scalar_lea.vmem %s2, %s374
        %p376 = pneg %p103
        %p377 = pneg %p100
        %p378 = pneg %p124
        %p379 = pneg %p121
        %p380 = pneg %p145
        %p381 = pneg %p142
        %p382 = pneg %p166
        %p383 = pneg %p163
        %p384 = pneg %p187
        %p385 = pneg %p184
        %p386 = pneg %p208
        %p387 = pneg %p205
        %p388 = pneg %p229
        %p389 = pneg %p226
        %p390 = pneg %p250
        %p391 = pneg %p247
        %p392 = pneg %p271
        %p393 = pneg %p268
        %p394 = pneg %p292
        %p395 = pneg %p289
        %s396 = smul.u32 16, %s28
        %p397 = scmp.lt.s32.totalorder %s396, 31
        %s398 = scalar_select %p397, %s396, 31
        %s399 = smul.addr %s398, 2
        %s400 = smul.addr %s399, 4
        %s401 = scalar_lea.vmem %s1, %s400
        %s402 = smul.u32 16, %s28
        %p403 = scmp.lt.s32.totalorder %s28, 1
        %s404 = scalar_select %p403, %s28, 1
        %s405 = smul.addr %s404, 2
        %s406 = scalar_lea.vmem %s2, %s405
        %p408 = scmp.eq.s32.totalorder %s27, 0
        %p409 = scmp.eq.s32.totalorder %s28, 0
        %p410 = pnand %p408, %p409
        %p411 = pneg %p410
        // Predicated region
        $region65: #{gcn_forward.1} parent=63 // pred_check
          _
        $region66: #{gcn_forward.1} parent=63 // pred_check_branch
          %413 = sbr.rel (%p410) target = $region68
        $region67: #{gcn_forward.1} parent=63 // pred_region
          %v414 = vld [vmem:[%s0] sm:$0xf]
          %v415 = vld [vmem:[%s0 + $0x4] sm:$0xf]
          %v416 = vld [vmem:[%s0 + $0x8] sm:$0xf]
          %v417 = vld [vmem:[%s0 + $0xc] sm:$0xf]
          %v418 = vld [vmem:[%s0 + $0x10] sm:$0xf]
          %v419 = vld [vmem:[%s0 + $0x14] sm:$0xf]
          %v420 = vld [vmem:[%s0 + $0x18] sm:$0xf]
          %v421 = vld [vmem:[%s0 + $0x1c] sm:$0xf]
          %v422 = vld [vmem:[%s0 + $0x20] sm:$0xf]
          %v423 = vld [vmem:[%s0 + $0x24] sm:$0xf]
          %v424 = vld [vmem:[%s0 + $0x28] sm:$0xf]
          %v425 = vld [vmem:[%s0 + $0x2c] sm:$0xf]
          %v426 = vld [vmem:[%s0 + $0x30] sm:$0xf]
          %v427 = vld [vmem:[%s0 + $0x34] sm:$0xf]
          %v428 = vld [vmem:[%s0 + $0x38] sm:$0xf]
          %v429 = vld [vmem:[%s0 + $0x3c] sm:$0xf]
          %v430 = vld [vmem:[%s0 + $0x40] sm:$0xf]
          %v431 = vld [vmem:[%s0 + $0x44] sm:$0xf]
          %v432 = vld [vmem:[%s0 + $0x48] sm:$0xf]
          %v433 = vld [vmem:[%s0 + $0x4c] sm:$0xf]
          %v434 = vld [vmem:[%s0 + $0x50] sm:$0xf]
          %v435 = vld [vmem:[%s0 + $0x54] sm:$0xf]
          %v436 = vld [vmem:[%s0 + $0x58] sm:$0xf]
          %v437 = vld [vmem:[%s0 + $0x5c] sm:$0xf]
          %v438 = vld [vmem:[%s0 + $0x60] sm:$0xf]
          %v439 = vld [vmem:[%s0 + $0x64] sm:$0xf]
          %v440 = vld [vmem:[%s0 + $0x68] sm:$0xf]
          %v441 = vld [vmem:[%s0 + $0x6c] sm:$0xf]
          %v442 = vld [vmem:[%s0 + $0x70] sm:$0xf]
          %v443 = vld [vmem:[%s0 + $0x74] sm:$0xf]
          %v444 = vld [vmem:[%s0 + $0x78] sm:$0xf]
          %v445 = vld [vmem:[%s0 + $0x7c] sm:$0xf]
          %v446 = vld [vmem:[%s4] sm:$0x3]
          %v479 = vunpack.c.l.b16 %v414
          %v480 = vunpack.c.l.b16 %v415
          %v481 = vunpack.c.l.b16 %v416
          %v482 = vunpack.c.l.b16 %v417
          %v483 = vunpack.c.l.b16 %v418
          %v484 = vunpack.c.l.b16 %v419
          %v485 = vunpack.c.l.b16 %v420
          %v486 = vunpack.c.l.b16 %v421
          %v487 = vunpack.c.l.b16 %v422
          %v488 = vunpack.c.l.b16 %v423
          %v489 = vunpack.c.l.b16 %v424
          %v490 = vunpack.c.l.b16 %v425
          %v491 = vunpack.c.l.b16 %v426
          %v492 = vunpack.c.l.b16 %v427
          %v493 = vunpack.c.l.b16 %v428
          %v494 = vunpack.c.l.b16 %v429
          %v495 = vunpack.c.l.b16 %v430
          %v496 = vunpack.c.l.b16 %v431
          %v497 = vunpack.c.l.b16 %v432
          %v498 = vunpack.c.l.b16 %v433
          %v499 = vunpack.c.l.b16 %v434
          %v500 = vunpack.c.l.b16 %v435
          %v501 = vunpack.c.l.b16 %v436
          %v502 = vunpack.c.l.b16 %v437
          %v503 = vunpack.c.l.b16 %v438
          %v504 = vunpack.c.l.b16 %v439
          %v505 = vunpack.c.l.b16 %v440
          %v506 = vunpack.c.l.b16 %v441
          %v507 = vunpack.c.l.b16 %v442
          %v508 = vunpack.c.l.b16 %v443
          %v509 = vunpack.c.l.b16 %v444
          %v510 = vunpack.c.l.b16 %v445
          %v511 = vpack.c.b16 %v480, %v479
          %v512 = vpack.c.b16 %v482, %v481
          %v513 = vpack.c.b16 %v484, %v483
          %v514 = vpack.c.b16 %v486, %v485
          %v515 = vpack.c.b16 %v488, %v487
          %v516 = vpack.c.b16 %v490, %v489
          %v517 = vpack.c.b16 %v492, %v491
          %v518 = vpack.c.b16 %v494, %v493
          %v519 = vpack.c.b16 %v496, %v495
          %v520 = vpack.c.b16 %v498, %v497
          %v521 = vpack.c.b16 %v500, %v499
          %v522 = vpack.c.b16 %v502, %v501
          %v523 = vpack.c.b16 %v504, %v503
          %v524 = vpack.c.b16 %v506, %v505
          %v525 = vpack.c.b16 %v508, %v507
          %v526 = vpack.c.b16 %v510, %v509
          %vm527 = vcmask 31744
          %v529 = vsel %vm527, %v511, 0
          %v532 = vsel %vm527, %v512, 0
          %v535 = vsel %vm527, %v513, 0
          %v538 = vsel %vm527, %v514, 0
          %v541 = vsel %vm527, %v515, 0
          %v544 = vsel %vm527, %v516, 0
          %v547 = vsel %vm527, %v517, 0
          %v550 = vsel %vm527, %v518, 0
          %v553 = vsel %vm527, %v519, 0
          %v556 = vsel %vm527, %v520, 0
          %v559 = vsel %vm527, %v521, 0
          %v562 = vsel %vm527, %v522, 0
          %v565 = vsel %vm527, %v523, 0
          %v568 = vsel %vm527, %v524, 0
          %v571 = vsel %vm527, %v525, 0
          %v574 = vsel %vm527, %v526, 0
          %vm576 = vcmask 1041408
          %v578 = vsel %vm576, %v446, 0
          %580 = vmatpush.bf16.msra.mxu0 0
          %581 = vmatpush.bf16.msra.mxu0 0
          %582 = vmatpush.bf16.msra.mxu0 0
          %583 = vmatpush.bf16.msra.mxu0 0
          %584 = vmatpush.bf16.msra.mxu0 0
          %585 = vmatpush.bf16.msra.mxu0 0
          %586 = vmatpush.bf16.msra.mxu0 0
          %587 = vmatpush.bf16.msra.mxu0 %v578
          %588 = vmatmul.bf16.gmra.mxu0 %v529
          %v589 = vpop.f32.mrf.mxu0
          %v590 = vadd.f32 0.0, %v589
          %v591 = vpop.f32.mrf.mxu0
          %v592 = vadd.f32 0.0, %v591
          %593 = vmatmul.bf16.gmra.mxu0 %v532
          %v594 = vpop.f32.mrf.mxu0
          %v595 = vadd.f32 0.0, %v594
          %v596 = vpop.f32.mrf.mxu0
          %v597 = vadd.f32 0.0, %v596
          %598 = vmatmul.bf16.gmra.mxu0 %v535
          %v599 = vpop.f32.mrf.mxu0
          %v600 = vadd.f32 0.0, %v599
          %v601 = vpop.f32.mrf.mxu0
          %v602 = vadd.f32 0.0, %v601
          %603 = vmatmul.bf16.gmra.mxu0 %v538
          %v604 = vpop.f32.mrf.mxu0
          %v605 = vadd.f32 0.0, %v604
          %v606 = vpop.f32.mrf.mxu0
          %v607 = vadd.f32 0.0, %v606
          %608 = vmatmul.bf16.gmra.mxu0 %v541
          %v609 = vpop.f32.mrf.mxu0
          %v610 = vadd.f32 0.0, %v609
          %v611 = vpop.f32.mrf.mxu0
          %v612 = vadd.f32 0.0, %v611
          %613 = vmatmul.bf16.gmra.mxu0 %v544
          %v614 = vpop.f32.mrf.mxu0
          %v615 = vadd.f32 0.0, %v614
          %v616 = vpop.f32.mrf.mxu0
          %v617 = vadd.f32 0.0, %v616
          %618 = vmatmul.bf16.gmra.mxu0 %v547
          %v619 = vpop.f32.mrf.mxu0
          %v620 = vadd.f32 0.0, %v619
          %v621 = vpop.f32.mrf.mxu0
          %v622 = vadd.f32 0.0, %v621
          %623 = vmatmul.bf16.gmra.mxu0 %v550
          %v624 = vpop.f32.mrf.mxu0
          %v625 = vadd.f32 0.0, %v624
          %v626 = vpop.f32.mrf.mxu0
          %v627 = vadd.f32 0.0, %v626
          %628 = vmatmul.bf16.gmra.mxu0 %v553
          %v629 = vpop.f32.mrf.mxu0
          %v630 = vadd.f32 0.0, %v629
          %v631 = vpop.f32.mrf.mxu0
          %v632 = vadd.f32 0.0, %v631
          %633 = vmatmul.bf16.gmra.mxu0 %v556
          %v634 = vpop.f32.mrf.mxu0
          %v635 = vadd.f32 0.0, %v634
          %v636 = vpop.f32.mrf.mxu0
          %v637 = vadd.f32 0.0, %v636
          %638 = vmatmul.bf16.gmra.mxu0 %v559
          %v639 = vpop.f32.mrf.mxu0
          %v640 = vadd.f32 0.0, %v639
          %v641 = vpop.f32.mrf.mxu0
          %v642 = vadd.f32 0.0, %v641
          %643 = vmatmul.bf16.gmra.mxu0 %v562
          %v644 = vpop.f32.mrf.mxu0
          %v645 = vadd.f32 0.0, %v644
          %v646 = vpop.f32.mrf.mxu0
          %v647 = vadd.f32 0.0, %v646
          %648 = vmatmul.bf16.gmra.mxu0 %v565
          %v649 = vpop.f32.mrf.mxu0
          %v650 = vadd.f32 0.0, %v649
          %v651 = vpop.f32.mrf.mxu0
          %v652 = vadd.f32 0.0, %v651
          %653 = vmatmul.bf16.gmra.mxu0 %v568
          %v654 = vpop.f32.mrf.mxu0
          %v655 = vadd.f32 0.0, %v654
          %v656 = vpop.f32.mrf.mxu0
          %v657 = vadd.f32 0.0, %v656
          %658 = vmatmul.bf16.gmra.mxu0 %v571
          %v659 = vpop.f32.mrf.mxu0
          %v660 = vadd.f32 0.0, %v659
          %v661 = vpop.f32.mrf.mxu0
          %v662 = vadd.f32 0.0, %v661
          %663 = vmatmul.bf16.gmra.mxu0 %v574
          %v664 = vpop.f32.mrf.mxu0
          %v665 = vadd.f32 0.0, %v664
          %v666 = vpop.f32.mrf.mxu0
          %v667 = vadd.f32 0.0, %v666
          %668 = vdwg.mxu0
          %v669 = vpack.c.bf16 %v590, %v590
          %v670 = vpack.c.bf16 %v592, %v592
          %v671 = vpack.c.bf16 %v595, %v595
          %v672 = vpack.c.bf16 %v597, %v597
          %v673 = vpack.c.bf16 %v600, %v600
          %v674 = vpack.c.bf16 %v602, %v602
          %v675 = vpack.c.bf16 %v605, %v605
          %v676 = vpack.c.bf16 %v607, %v607
          %v677 = vpack.c.bf16 %v610, %v610
          %v678 = vpack.c.bf16 %v612, %v612
          %v679 = vpack.c.bf16 %v615, %v615
          %v680 = vpack.c.bf16 %v617, %v617
          %v681 = vpack.c.bf16 %v620, %v620
          %v682 = vpack.c.bf16 %v622, %v622
          %v683 = vpack.c.bf16 %v625, %v625
          %v684 = vpack.c.bf16 %v627, %v627
          %v685 = vpack.c.bf16 %v630, %v630
          %v686 = vpack.c.bf16 %v632, %v632
          %v687 = vpack.c.bf16 %v635, %v635
          %v688 = vpack.c.bf16 %v637, %v637
          %v689 = vpack.c.bf16 %v640, %v640
          %v690 = vpack.c.bf16 %v642, %v642
          %v691 = vpack.c.bf16 %v645, %v645
          %v692 = vpack.c.bf16 %v647, %v647
          %v693 = vpack.c.bf16 %v650, %v650
          %v694 = vpack.c.bf16 %v652, %v652
          %v695 = vpack.c.bf16 %v655, %v655
          %v696 = vpack.c.bf16 %v657, %v657
          %v697 = vpack.c.bf16 %v660, %v660
          %v698 = vpack.c.bf16 %v662, %v662
          %v699 = vpack.c.bf16 %v665, %v665
          %v700 = vpack.c.bf16 %v667, %v667
          %701 = vst [vmem:[#allocation2] sm:$0xf] %v669
          %702 = vst [vmem:[#allocation2 + $0x4] sm:$0xf] %v670
          %703 = vst [vmem:[#allocation2 + $0x8] sm:$0xf] %v671
          %704 = vst [vmem:[#allocation2 + $0xc] sm:$0xf] %v672
          %705 = vst [vmem:[#allocation2 + $0x10] sm:$0xf] %v673
          %706 = vst [vmem:[#allocation2 + $0x14] sm:$0xf] %v674
          %707 = vst [vmem:[#allocation2 + $0x18] sm:$0xf] %v675
          %708 = vst [vmem:[#allocation2 + $0x1c] sm:$0xf] %v676
          %709 = vst [vmem:[#allocation2 + $0x20] sm:$0xf] %v677
          %710 = vst [vmem:[#allocation2 + $0x24] sm:$0xf] %v678
          %711 = vst [vmem:[#allocation2 + $0x28] sm:$0xf] %v679
          %712 = vst [vmem:[#allocation2 + $0x2c] sm:$0xf] %v680
          %713 = vst [vmem:[#allocation2 + $0x30] sm:$0xf] %v681
          %714 = vst [vmem:[#allocation2 + $0x34] sm:$0xf] %v682
          %715 = vst [vmem:[#allocation2 + $0x38] sm:$0xf] %v683
          %716 = vst [vmem:[#allocation2 + $0x3c] sm:$0xf] %v684
          %717 = vst [vmem:[#allocation2 + $0x40] sm:$0xf] %v685
          %718 = vst [vmem:[#allocation2 + $0x44] sm:$0xf] %v686
          %719 = vst [vmem:[#allocation2 + $0x48] sm:$0xf] %v687
          %720 = vst [vmem:[#allocation2 + $0x4c] sm:$0xf] %v688
          %721 = vst [vmem:[#allocation2 + $0x50] sm:$0xf] %v689
          %722 = vst [vmem:[#allocation2 + $0x54] sm:$0xf] %v690
          %723 = vst [vmem:[#allocation2 + $0x58] sm:$0xf] %v691
          %724 = vst [vmem:[#allocation2 + $0x5c] sm:$0xf] %v692
          %725 = vst [vmem:[#allocation2 + $0x60] sm:$0xf] %v693
          %726 = vst [vmem:[#allocation2 + $0x64] sm:$0xf] %v694
          %727 = vst [vmem:[#allocation2 + $0x68] sm:$0xf] %v695
          %728 = vst [vmem:[#allocation2 + $0x6c] sm:$0xf] %v696
          %729 = vst [vmem:[#allocation2 + $0x70] sm:$0xf] %v697
          %730 = vst [vmem:[#allocation2 + $0x74] sm:$0xf] %v698
          %731 = vst [vmem:[#allocation2 + $0x78] sm:$0xf] %v699
          %732 = vst [vmem:[#allocation2 + $0x7c] sm:$0xf] %v700
          %733 = vst [vmem:[#allocation4] sm:$0x3] 0.0
        $region68: #{gcn_forward.1} parent=63 // pred_fallthru
          _
        %s734 = smul.u32 %s28, 128
        %v735 = vld [vmem:[%s401] sm:$0xff]
        %v736 = vld [vmem:[%s401 + $0x8] sm:$0xff]
        %v737 = vld [vmem:[%s401 + $0x10] sm:$0xff]
        %v738 = vld [vmem:[%s401 + $0x18] sm:$0xff]
        %v739 = vld [vmem:[%s401 + $0x20] sm:$0xff]
        %v740 = vld [vmem:[%s401 + $0x28] sm:$0xff]
        %v741 = vld [vmem:[%s401 + $0x30] sm:$0xff]
        %v742 = vld [vmem:[%s401 + $0x38] sm:$0xff]
        %v743 = vld [vmem:[%s401 + $0x40] sm:$0xff]
        %v744 = vld [vmem:[%s401 + $0x48] sm:$0xff]
        %v745 = vld [vmem:[%s401 + $0x50] sm:$0xff]
        %v746 = vld [vmem:[%s401 + $0x58] sm:$0xff]
        %v747 = vld [vmem:[%s401 + $0x60] sm:$0xff]
        %v748 = vld [vmem:[%s401 + $0x68] sm:$0xff]
        %v749 = vld [vmem:[%s401 + $0x70] sm:$0xff]
        %v750 = vld [vmem:[%s401 + $0x78] sm:$0xff]
        // Predicated region
        $region69: #{gcn_forward.1} parent=63 // pred_check
          %p751 = pneg %p408
        $region70: #{gcn_forward.1} parent=63 // pred_check_branch
          %753 = sbr.rel (%p751) target = $region72
        $region71: #{gcn_forward.1} parent=63 // pred_region
          %v754 = vld [vmem:[#allocation2] sm:$0xf]
          %v755 = vld [vmem:[#allocation2 + $0x4] sm:$0xf]
          %v756 = vld [vmem:[#allocation2 + $0x8] sm:$0xf]
          %v757 = vld [vmem:[#allocation2 + $0xc] sm:$0xf]
          %v758 = vld [vmem:[#allocation2 + $0x10] sm:$0xf]
          %v759 = vld [vmem:[#allocation2 + $0x14] sm:$0xf]
          %v760 = vld [vmem:[#allocation2 + $0x18] sm:$0xf]
          %v761 = vld [vmem:[#allocation2 + $0x1c] sm:$0xf]
          %v762 = vld [vmem:[#allocation2 + $0x20] sm:$0xf]
          %v763 = vld [vmem:[#allocation2 + $0x24] sm:$0xf]
          %v764 = vld [vmem:[#allocation2 + $0x28] sm:$0xf]
          %v765 = vld [vmem:[#allocation2 + $0x2c] sm:$0xf]
          %v766 = vld [vmem:[#allocation2 + $0x30] sm:$0xf]
          %v767 = vld [vmem:[#allocation2 + $0x34] sm:$0xf]
          %v768 = vld [vmem:[#allocation2 + $0x38] sm:$0xf]
          %v769 = vld [vmem:[#allocation2 + $0x3c] sm:$0xf]
          %v770 = vld [vmem:[#allocation2 + $0x40] sm:$0xf]
          %v771 = vld [vmem:[#allocation2 + $0x44] sm:$0xf]
          %v772 = vld [vmem:[#allocation2 + $0x48] sm:$0xf]
          %v773 = vld [vmem:[#allocation2 + $0x4c] sm:$0xf]
          %v774 = vld [vmem:[#allocation2 + $0x50] sm:$0xf]
          %v775 = vld [vmem:[#allocation2 + $0x54] sm:$0xf]
          %v776 = vld [vmem:[#allocation2 + $0x58] sm:$0xf]
          %v777 = vld [vmem:[#allocation2 + $0x5c] sm:$0xf]
          %v778 = vld [vmem:[#allocation2 + $0x60] sm:$0xf]
          %v779 = vld [vmem:[#allocation2 + $0x64] sm:$0xf]
          %v780 = vld [vmem:[#allocation2 + $0x68] sm:$0xf]
          %v781 = vld [vmem:[#allocation2 + $0x6c] sm:$0xf]
          %v782 = vld [vmem:[#allocation2 + $0x70] sm:$0xf]
          %v783 = vld [vmem:[#allocation2 + $0x74] sm:$0xf]
          %v784 = vld [vmem:[#allocation2 + $0x78] sm:$0xf]
          %v785 = vld [vmem:[#allocation2 + $0x7c] sm:$0xf]
          %v786 = vld [vmem:[%s5] sm:$0x1]
          %v788 = vperm.slane %v786, 0
          %v806 = vunpack.c.l.b16 %v735
          %v807 = vunpack.c.h.b16 %v735
          %v808 = vunpack.c.l.b16 %v736
          %v809 = vunpack.c.h.b16 %v736
          %v810 = vunpack.c.l.b16 %v737
          %v811 = vunpack.c.h.b16 %v737
          %v812 = vunpack.c.l.b16 %v738
          %v813 = vunpack.c.h.b16 %v738
          %v814 = vunpack.c.l.b16 %v739
          %v815 = vunpack.c.h.b16 %v739
          %v816 = vunpack.c.l.b16 %v740
          %v817 = vunpack.c.h.b16 %v740
          %v818 = vunpack.c.l.b16 %v741
          %v819 = vunpack.c.h.b16 %v741
          %v820 = vunpack.c.l.b16 %v742
          %v821 = vunpack.c.h.b16 %v742
          %v822 = vunpack.c.l.b16 %v743
          %v823 = vunpack.c.h.b16 %v743
          %v824 = vunpack.c.l.b16 %v744
          %v825 = vunpack.c.h.b16 %v744
          %v826 = vunpack.c.l.b16 %v745
          %v827 = vunpack.c.h.b16 %v745
          %v828 = vunpack.c.l.b16 %v746
          %v829 = vunpack.c.h.b16 %v746
          %v830 = vunpack.c.l.b16 %v747
          %v831 = vunpack.c.h.b16 %v747
          %v832 = vunpack.c.l.b16 %v748
          %v833 = vunpack.c.h.b16 %v748
          %v834 = vunpack.c.l.b16 %v749
          %v835 = vunpack.c.h.b16 %v749
          %v836 = vunpack.c.l.b16 %v750
          %v837 = vunpack.c.h.b16 %v750
          %v838 = vpack.c.b16 %v808, %v806
          %v839 = vpack.c.b16 %v809, %v807
          %v840 = vpack.c.b16 %v812, %v810
          %v841 = vpack.c.b16 %v813, %v811
          %v842 = vpack.c.b16 %v816, %v814
          %v843 = vpack.c.b16 %v817, %v815
          %v844 = vpack.c.b16 %v820, %v818
          %v845 = vpack.c.b16 %v821, %v819
          %v846 = vpack.c.b16 %v824, %v822
          %v847 = vpack.c.b16 %v825, %v823
          %v848 = vpack.c.b16 %v828, %v826
          %v849 = vpack.c.b16 %v829, %v827
          %v850 = vpack.c.b16 %v832, %v830
          %v851 = vpack.c.b16 %v833, %v831
          %v852 = vpack.c.b16 %v836, %v834
          %v853 = vpack.c.b16 %v837, %v835
          %v902 = vunpack.c.l.b16 %v754
          %v903 = vunpack.c.l.b16 %v755
          %v904 = vunpack.c.l.b16 %v756
          %v905 = vunpack.c.l.b16 %v757
          %v906 = vunpack.c.l.b16 %v758
          %v907 = vunpack.c.l.b16 %v759
          %v908 = vunpack.c.l.b16 %v760
          %v909 = vunpack.c.l.b16 %v761
          %v910 = vunpack.c.l.b16 %v762
          %v911 = vunpack.c.l.b16 %v763
          %v912 = vunpack.c.l.b16 %v764
          %v913 = vunpack.c.l.b16 %v765
          %v914 = vunpack.c.l.b16 %v766
          %v915 = vunpack.c.l.b16 %v767
          %v916 = vunpack.c.l.b16 %v768
          %v917 = vunpack.c.l.b16 %v769
          %v918 = vunpack.c.l.b16 %v770
          %v919 = vunpack.c.l.b16 %v771
          %v920 = vunpack.c.l.b16 %v772
          %v921 = vunpack.c.l.b16 %v773
          %v922 = vunpack.c.l.b16 %v774
          %v923 = vunpack.c.l.b16 %v775
          %v924 = vunpack.c.l.b16 %v776
          %v925 = vunpack.c.l.b16 %v777
          %v926 = vunpack.c.l.b16 %v778
          %v927 = vunpack.c.l.b16 %v779
          %v928 = vunpack.c.l.b16 %v780
          %v929 = vunpack.c.l.b16 %v781
          %v930 = vunpack.c.l.b16 %v782
          %v931 = vunpack.c.l.b16 %v783
          %v932 = vunpack.c.l.b16 %v784
          %v933 = vunpack.c.l.b16 %v785
          %v934 = vpack.c.b16 %v903, %v902
          %v935 = vpack.c.b16 %v905, %v904
          %v936 = vpack.c.b16 %v907, %v906
          %v937 = vpack.c.b16 %v909, %v908
          %v938 = vpack.c.b16 %v911, %v910
          %v939 = vpack.c.b16 %v913, %v912
          %v940 = vpack.c.b16 %v915, %v914
          %v941 = vpack.c.b16 %v917, %v916
          %v942 = vpack.c.b16 %v919, %v918
          %v943 = vpack.c.b16 %v921, %v920
          %v944 = vpack.c.b16 %v923, %v922
          %v945 = vpack.c.b16 %v925, %v924
          %v946 = vpack.c.b16 %v927, %v926
          %v947 = vpack.c.b16 %v929, %v928
          %v948 = vpack.c.b16 %v931, %v930
          %v949 = vpack.c.b16 %v933, %v932
          %966 = vmatpush.bf16.msra.mxu0 %v941
          %967 = vmatpush.bf16.msra.mxu0 %v940
          %968 = vmatpush.bf16.msra.mxu0 %v939
          %969 = vmatpush.bf16.msra.mxu0 %v938
          %970 = vmatpush.bf16.msra.mxu0 %v937
          %971 = vmatpush.bf16.msra.mxu0 %v936
          %972 = vmatpush.bf16.msra.mxu0 %v935
          %973 = vmatpush.bf16.msra.mxu0 %v934
          %974 = vmatmul.bf16.gmra.mxu0 %v838
          %v975 = vpop.f32.mrf.mxu0
          %v976 = vadd.f32 %v788, %v975
          %v977 = vpop.f32.mrf.mxu0
          %v978 = vadd.f32 %v788, %v977
          %979 = vmatmul.bf16.gmra.mxu0 %v840
          %v980 = vpop.f32.mrf.mxu0
          %v981 = vadd.f32 %v788, %v980
          %v982 = vpop.f32.mrf.mxu0
          %v983 = vadd.f32 %v788, %v982
          %984 = vmatmul.bf16.gmra.mxu0 %v842
          %v985 = vpop.f32.mrf.mxu0
          %v986 = vadd.f32 %v788, %v985
          %v987 = vpop.f32.mrf.mxu0
          %v988 = vadd.f32 %v788, %v987
          %989 = vmatmul.bf16.gmra.mxu0 %v844
          %v990 = vpop.f32.mrf.mxu0
          %v991 = vadd.f32 %v788, %v990
          %v992 = vpop.f32.mrf.mxu0
          %v993 = vadd.f32 %v788, %v992
          %994 = vmatmul.bf16.gmra.mxu0 %v846
          %v995 = vpop.f32.mrf.mxu0
          %v996 = vadd.f32 %v788, %v995
          %v997 = vpop.f32.mrf.mxu0
          %v998 = vadd.f32 %v788, %v997
          %999 = vmatmul.bf16.gmra.mxu0 %v848
          %v1000 = vpop.f32.mrf.mxu0
          %v1001 = vadd.f32 %v788, %v1000
          %v1002 = vpop.f32.mrf.mxu0
          %v1003 = vadd.f32 %v788, %v1002
          %1004 = vmatmul.bf16.gmra.mxu0 %v850
          %v1005 = vpop.f32.mrf.mxu0
          %v1006 = vadd.f32 %v788, %v1005
          %v1007 = vpop.f32.mrf.mxu0
          %v1008 = vadd.f32 %v788, %v1007
          %1009 = vmatmul.bf16.gmra.mxu0 %v852
          %v1010 = vpop.f32.mrf.mxu0
          %v1011 = vadd.f32 %v788, %v1010
          %v1012 = vpop.f32.mrf.mxu0
          %v1013 = vadd.f32 %v788, %v1012
          %1014 = vdwg.mxu0
          %1015 = vmatpush.bf16.msra.mxu0 %v949
          %1016 = vmatpush.bf16.msra.mxu0 %v948
          %1017 = vmatpush.bf16.msra.mxu0 %v947
          %1018 = vmatpush.bf16.msra.mxu0 %v946
          %1019 = vmatpush.bf16.msra.mxu0 %v945
          %1020 = vmatpush.bf16.msra.mxu0 %v944
          %1021 = vmatpush.bf16.msra.mxu0 %v943
          %1022 = vmatpush.bf16.msra.mxu0 %v942
          %1023 = vmatmul.bf16.gmra.mxu0 %v839
          %v1024 = vpop.f32.mrf.mxu0
          %v1025 = vadd.f32 %v976, %v1024
          %v1026 = vpop.f32.mrf.mxu0
          %v1027 = vadd.f32 %v978, %v1026
          %1028 = vmatmul.bf16.gmra.mxu0 %v841
          %v1029 = vpop.f32.mrf.mxu0
          %v1030 = vadd.f32 %v981, %v1029
          %v1031 = vpop.f32.mrf.mxu0
          %v1032 = vadd.f32 %v983, %v1031
          %1033 = vmatmul.bf16.gmra.mxu0 %v843
          %v1034 = vpop.f32.mrf.mxu0
          %v1035 = vadd.f32 %v986, %v1034
          %v1036 = vpop.f32.mrf.mxu0
          %v1037 = vadd.f32 %v988, %v1036
          %1038 = vmatmul.bf16.gmra.mxu0 %v845
          %v1039 = vpop.f32.mrf.mxu0
          %v1040 = vadd.f32 %v991, %v1039
          %v1041 = vpop.f32.mrf.mxu0
          %v1042 = vadd.f32 %v993, %v1041
          %1043 = vmatmul.bf16.gmra.mxu0 %v847
          %v1044 = vpop.f32.mrf.mxu0
          %v1045 = vadd.f32 %v996, %v1044
          %v1046 = vpop.f32.mrf.mxu0
          %v1047 = vadd.f32 %v998, %v1046
          %1048 = vmatmul.bf16.gmra.mxu0 %v849
          %v1049 = vpop.f32.mrf.mxu0
          %v1050 = vadd.f32 %v1001, %v1049
          %v1051 = vpop.f32.mrf.mxu0
          %v1052 = vadd.f32 %v1003, %v1051
          %1053 = vmatmul.bf16.gmra.mxu0 %v851
          %v1054 = vpop.f32.mrf.mxu0
          %v1055 = vadd.f32 %v1006, %v1054
          %v1056 = vpop.f32.mrf.mxu0
          %v1057 = vadd.f32 %v1008, %v1056
          %1058 = vmatmul.bf16.gmra.mxu0 %v853
          %v1059 = vpop.f32.mrf.mxu0
          %v1060 = vadd.f32 %v1011, %v1059
          %v1061 = vpop.f32.mrf.mxu0
          %v1062 = vadd.f32 %v1013, %v1061
          %1063 = vdwg.mxu0
          %v1064 = vmax.f32 %v1025, 0.0
          %v1065 = vmax.f32 %v1027, 0.0
          %v1066 = vmax.f32 %v1030, 0.0
          %v1067 = vmax.f32 %v1032, 0.0
          %v1068 = vmax.f32 %v1035, 0.0
          %v1069 = vmax.f32 %v1037, 0.0
          %v1070 = vmax.f32 %v1040, 0.0
          %v1071 = vmax.f32 %v1042, 0.0
          %v1072 = vmax.f32 %v1045, 0.0
          %v1073 = vmax.f32 %v1047, 0.0
          %v1074 = vmax.f32 %v1050, 0.0
          %v1075 = vmax.f32 %v1052, 0.0
          %v1076 = vmax.f32 %v1055, 0.0
          %v1077 = vmax.f32 %v1057, 0.0
          %v1078 = vmax.f32 %v1060, 0.0
          %v1079 = vmax.f32 %v1062, 0.0
          %v1080 = vpack.c.bf16 %v1065, %v1064
          %v1081 = vpack.c.bf16 %v1067, %v1066
          %v1082 = vpack.c.bf16 %v1069, %v1068
          %v1083 = vpack.c.bf16 %v1071, %v1070
          %v1084 = vpack.c.bf16 %v1073, %v1072
          %v1085 = vpack.c.bf16 %v1075, %v1074
          %v1086 = vpack.c.bf16 %v1077, %v1076
          %v1087 = vpack.c.bf16 %v1079, %v1078
          %v1088 = vld [vmem:[%s6] sm:$0xf]
          %v1089 = vld [vmem:[%s6 + $0x4] sm:$0xf]
          %v1090 = vld [vmem:[%s6 + $0x8] sm:$0xf]
          %v1091 = vld [vmem:[%s6 + $0xc] sm:$0xf]
          %v1092 = vld [vmem:[%s6 + $0x10] sm:$0xf]
          %v1093 = vld [vmem:[%s6 + $0x14] sm:$0xf]
          %v1094 = vld [vmem:[%s6 + $0x18] sm:$0xf]
          %v1095 = vld [vmem:[%s6 + $0x1c] sm:$0xf]
          %v1096 = vld [vmem:[%s6 + $0x20] sm:$0xf]
          %v1097 = vld [vmem:[%s6 + $0x24] sm:$0xf]
          %v1098 = vld [vmem:[%s6 + $0x28] sm:$0xf]
          %v1099 = vld [vmem:[%s6 + $0x2c] sm:$0xf]
          %v1100 = vld [vmem:[%s6 + $0x30] sm:$0xf]
          %v1101 = vld [vmem:[%s6 + $0x34] sm:$0xf]
          %v1102 = vld [vmem:[%s6 + $0x38] sm:$0xf]
          %v1103 = vld [vmem:[%s6 + $0x3c] sm:$0xf]
          %v1120 = vunpack.c.l.b16 %v1088
          %v1121 = vunpack.c.l.b16 %v1089
          %v1122 = vunpack.c.l.b16 %v1090
          %v1123 = vunpack.c.l.b16 %v1091
          %v1124 = vunpack.c.l.b16 %v1092
          %v1125 = vunpack.c.l.b16 %v1093
          %v1126 = vunpack.c.l.b16 %v1094
          %v1127 = vunpack.c.l.b16 %v1095
          %v1128 = vunpack.c.l.b16 %v1096
          %v1129 = vunpack.c.l.b16 %v1097
          %v1130 = vunpack.c.l.b16 %v1098
          %v1131 = vunpack.c.l.b16 %v1099
          %v1132 = vunpack.c.l.b16 %v1100
          %v1133 = vunpack.c.l.b16 %v1101
          %v1134 = vunpack.c.l.b16 %v1102
          %v1135 = vunpack.c.l.b16 %v1103
          %v1136 = vpack.c.b16 %v1121, %v1120
          %v1137 = vpack.c.b16 %v1123, %v1122
          %v1138 = vpack.c.b16 %v1125, %v1124
          %v1139 = vpack.c.b16 %v1127, %v1126
          %v1140 = vpack.c.b16 %v1129, %v1128
          %v1141 = vpack.c.b16 %v1131, %v1130
          %v1142 = vpack.c.b16 %v1133, %v1132
          %v1143 = vpack.c.b16 %v1135, %v1134
          %1152 = vmatpush.bf16.msra.mxu0 %v1143
          %1153 = vmatpush.bf16.msra.mxu0 %v1142
          %1154 = vmatpush.bf16.msra.mxu0 %v1141
          %1155 = vmatpush.bf16.msra.mxu0 %v1140
          %1156 = vmatpush.bf16.msra.mxu0 %v1139
          %1157 = vmatpush.bf16.msra.mxu0 %v1138
          %1158 = vmatpush.bf16.msra.mxu0 %v1137
          %1159 = vmatpush.bf16.msra.mxu0 %v1136
          %1160 = vmatmul.bf16.gmra.mxu0 %v1080
          %v1161 = vpop.f32.mrf.mxu0
          %v1162 = vadd.f32 0.0, %v1161
          %v1163 = vpop.f32.mrf.mxu0
          %v1164 = vadd.f32 0.0, %v1163
          %1165 = vmatmul.bf16.gmra.mxu0 %v1081
          %v1166 = vpop.f32.mrf.mxu0
          %v1167 = vadd.f32 0.0, %v1166
          %v1168 = vpop.f32.mrf.mxu0
          %v1169 = vadd.f32 0.0, %v1168
          %1170 = vmatmul.bf16.gmra.mxu0 %v1082
          %v1171 = vpop.f32.mrf.mxu0
          %v1172 = vadd.f32 0.0, %v1171
          %v1173 = vpop.f32.mrf.mxu0
          %v1174 = vadd.f32 0.0, %v1173
          %1175 = vmatmul.bf16.gmra.mxu0 %v1083
          %v1176 = vpop.f32.mrf.mxu0
          %v1177 = vadd.f32 0.0, %v1176
          %v1178 = vpop.f32.mrf.mxu0
          %v1179 = vadd.f32 0.0, %v1178
          %1180 = vmatmul.bf16.gmra.mxu0 %v1084
          %v1181 = vpop.f32.mrf.mxu0
          %v1182 = vadd.f32 0.0, %v1181
          %v1183 = vpop.f32.mrf.mxu0
          %v1184 = vadd.f32 0.0, %v1183
          %1185 = vmatmul.bf16.gmra.mxu0 %v1085
          %v1186 = vpop.f32.mrf.mxu0
          %v1187 = vadd.f32 0.0, %v1186
          %v1188 = vpop.f32.mrf.mxu0
          %v1189 = vadd.f32 0.0, %v1188
          %1190 = vmatmul.bf16.gmra.mxu0 %v1086
          %v1191 = vpop.f32.mrf.mxu0
          %v1192 = vadd.f32 0.0, %v1191
          %v1193 = vpop.f32.mrf.mxu0
          %v1194 = vadd.f32 0.0, %v1193
          %1195 = vmatmul.bf16.gmra.mxu0 %v1087
          %v1196 = vpop.f32.mrf.mxu0
          %v1197 = vadd.f32 0.0, %v1196
          %v1198 = vpop.f32.mrf.mxu0
          %v1199 = vadd.f32 0.0, %v1198
          %1200 = vdwg.mxu0
          %v1201 = vpack.c.bf16 %v1162, %v1162
          %v1202 = vpack.c.bf16 %v1164, %v1164
          %v1203 = vpack.c.bf16 %v1167, %v1167
          %v1204 = vpack.c.bf16 %v1169, %v1169
          %v1205 = vpack.c.bf16 %v1172, %v1172
          %v1206 = vpack.c.bf16 %v1174, %v1174
          %v1207 = vpack.c.bf16 %v1177, %v1177
          %v1208 = vpack.c.bf16 %v1179, %v1179
          %v1209 = vpack.c.bf16 %v1182, %v1182
          %v1210 = vpack.c.bf16 %v1184, %v1184
          %v1211 = vpack.c.bf16 %v1187, %v1187
          %v1212 = vpack.c.bf16 %v1189, %v1189
          %v1213 = vpack.c.bf16 %v1192, %v1192
          %v1214 = vpack.c.bf16 %v1194, %v1194
          %v1215 = vpack.c.bf16 %v1197, %v1197
          %v1216 = vpack.c.bf16 %v1199, %v1199
          %s1217 = sshra.s32 %s734, 3
          %s1218 = sand.u32 %s734, 7
          %s1219 = smul.addr %s1217, 4
          %s1220 = scalar_lea.vmem [#allocation3], %s1219
          %1221 = vst [vmem:[%s1220] sm:$0xf] %v1201
          %1222 = vst [vmem:[%s1220 + $0x4] sm:$0xf] %v1202
          %1223 = vst [vmem:[%s1220 + $0x8] sm:$0xf] %v1203
          %1224 = vst [vmem:[%s1220 + $0xc] sm:$0xf] %v1204
          %1225 = vst [vmem:[%s1220 + $0x10] sm:$0xf] %v1205
          %1226 = vst [vmem:[%s1220 + $0x14] sm:$0xf] %v1206
          %1227 = vst [vmem:[%s1220 + $0x18] sm:$0xf] %v1207
          %1228 = vst [vmem:[%s1220 + $0x1c] sm:$0xf] %v1208
          %1229 = vst [vmem:[%s1220 + $0x20] sm:$0xf] %v1209
          %1230 = vst [vmem:[%s1220 + $0x24] sm:$0xf] %v1210
          %1231 = vst [vmem:[%s1220 + $0x28] sm:$0xf] %v1211
          %1232 = vst [vmem:[%s1220 + $0x2c] sm:$0xf] %v1212
          %1233 = vst [vmem:[%s1220 + $0x30] sm:$0xf] %v1213
          %1234 = vst [vmem:[%s1220 + $0x34] sm:$0xf] %v1214
          %1235 = vst [vmem:[%s1220 + $0x38] sm:$0xf] %v1215
          %1236 = vst [vmem:[%s1220 + $0x3c] sm:$0xf] %v1216
        $region72: #{gcn_forward.1} parent=63 // pred_fallthru
          _
        %p1237 = scmp.eq.s32.totalorder %s27, 1
        // Predicated region
        $region73: #{gcn_forward.1} parent=63 // pred_check
          %p1238 = pneg %p1237
        $region74: #{gcn_forward.1} parent=63 // pred_check_branch
          %1240 = sbr.rel (%p1238) target = $region76
        $region75: #{gcn_forward.1} parent=63 // pred_region
          %v1241 = vld [vmem:[#allocation3] sm:$0xf]
          %v1242 = vld [vmem:[#allocation3 + $0x4] sm:$0xf]
          %v1243 = vld [vmem:[#allocation3 + $0x8] sm:$0xf]
          %v1244 = vld [vmem:[#allocation3 + $0xc] sm:$0xf]
          %v1245 = vld [vmem:[#allocation3 + $0x10] sm:$0xf]
          %v1246 = vld [vmem:[#allocation3 + $0x14] sm:$0xf]
          %v1247 = vld [vmem:[#allocation3 + $0x18] sm:$0xf]
          %v1248 = vld [vmem:[#allocation3 + $0x1c] sm:$0xf]
          %v1249 = vld [vmem:[#allocation3 + $0x20] sm:$0xf]
          %v1250 = vld [vmem:[#allocation3 + $0x24] sm:$0xf]
          %v1251 = vld [vmem:[#allocation3 + $0x28] sm:$0xf]
          %v1252 = vld [vmem:[#allocation3 + $0x2c] sm:$0xf]
          %v1253 = vld [vmem:[#allocation3 + $0x30] sm:$0xf]
          %v1254 = vld [vmem:[#allocation3 + $0x34] sm:$0xf]
          %v1255 = vld [vmem:[#allocation3 + $0x38] sm:$0xf]
          %v1256 = vld [vmem:[#allocation3 + $0x3c] sm:$0xf]
          %v1257 = vld [vmem:[#allocation3 + $0x40] sm:$0xf]
          %v1258 = vld [vmem:[#allocation3 + $0x44] sm:$0xf]
          %v1259 = vld [vmem:[#allocation3 + $0x48] sm:$0xf]
          %v1260 = vld [vmem:[#allocation3 + $0x4c] sm:$0xf]
          %v1261 = vld [vmem:[#allocation3 + $0x50] sm:$0xf]
          %v1262 = vld [vmem:[#allocation3 + $0x54] sm:$0xf]
          %v1263 = vld [vmem:[#allocation3 + $0x58] sm:$0xf]
          %v1264 = vld [vmem:[#allocation3 + $0x5c] sm:$0xf]
          %v1265 = vld [vmem:[#allocation3 + $0x60] sm:$0xf]
          %v1266 = vld [vmem:[#allocation3 + $0x64] sm:$0xf]
          %v1267 = vld [vmem:[#allocation3 + $0x68] sm:$0xf]
          %v1268 = vld [vmem:[#allocation3 + $0x6c] sm:$0xf]
          %v1269 = vld [vmem:[#allocation3 + $0x70] sm:$0xf]
          %v1270 = vld [vmem:[#allocation3 + $0x74] sm:$0xf]
          %v1271 = vld [vmem:[#allocation3 + $0x78] sm:$0xf]
          %v1272 = vld [vmem:[#allocation3 + $0x7c] sm:$0xf]
          %v1273 = vld [vmem:[%s7] sm:$0x1]
          %v1275 = vperm.slane %v1273, 0
          %v1293 = vunpack.c.l.b16 %v735
          %v1294 = vunpack.c.h.b16 %v735
          %v1295 = vunpack.c.l.b16 %v736
          %v1296 = vunpack.c.h.b16 %v736
          %v1297 = vunpack.c.l.b16 %v737
          %v1298 = vunpack.c.h.b16 %v737
          %v1299 = vunpack.c.l.b16 %v738
          %v1300 = vunpack.c.h.b16 %v738
          %v1301 = vunpack.c.l.b16 %v739
          %v1302 = vunpack.c.h.b16 %v739
          %v1303 = vunpack.c.l.b16 %v740
          %v1304 = vunpack.c.h.b16 %v740
          %v1305 = vunpack.c.l.b16 %v741
          %v1306 = vunpack.c.h.b16 %v741
          %v1307 = vunpack.c.l.b16 %v742
          %v1308 = vunpack.c.h.b16 %v742
          %v1309 = vunpack.c.l.b16 %v743
          %v1310 = vunpack.c.h.b16 %v743
          %v1311 = vunpack.c.l.b16 %v744
          %v1312 = vunpack.c.h.b16 %v744
          %v1313 = vunpack.c.l.b16 %v745
          %v1314 = vunpack.c.h.b16 %v745
          %v1315 = vunpack.c.l.b16 %v746
          %v1316 = vunpack.c.h.b16 %v746
          %v1317 = vunpack.c.l.b16 %v747
          %v1318 = vunpack.c.h.b16 %v747
          %v1319 = vunpack.c.l.b16 %v748
          %v1320 = vunpack.c.h.b16 %v748
          %v1321 = vunpack.c.l.b16 %v749
          %v1322 = vunpack.c.h.b16 %v749
          %v1323 = vunpack.c.l.b16 %v750
          %v1324 = vunpack.c.h.b16 %v750
          %v1325 = vpack.c.b16 %v1295, %v1293
          %v1326 = vpack.c.b16 %v1296, %v1294
          %v1327 = vpack.c.b16 %v1299, %v1297
          %v1328 = vpack.c.b16 %v1300, %v1298
          %v1329 = vpack.c.b16 %v1303, %v1301
          %v1330 = vpack.c.b16 %v1304, %v1302
          %v1331 = vpack.c.b16 %v1307, %v1305
          %v1332 = vpack.c.b16 %v1308, %v1306
          %v1333 = vpack.c.b16 %v1311, %v1309
          %v1334 = vpack.c.b16 %v1312, %v1310
          %v1335 = vpack.c.b16 %v1315, %v1313
          %v1336 = vpack.c.b16 %v1316, %v1314
          %v1337 = vpack.c.b16 %v1319, %v1317
          %v1338 = vpack.c.b16 %v1320, %v1318
          %v1339 = vpack.c.b16 %v1323, %v1321
          %v1340 = vpack.c.b16 %v1324, %v1322
          %v1389 = vunpack.c.l.b16 %v1241
          %v1390 = vunpack.c.l.b16 %v1242
          %v1391 = vunpack.c.l.b16 %v1243
          %v1392 = vunpack.c.l.b16 %v1244
          %v1393 = vunpack.c.l.b16 %v1245
          %v1394 = vunpack.c.l.b16 %v1246
          %v1395 = vunpack.c.l.b16 %v1247
          %v1396 = vunpack.c.l.b16 %v1248
          %v1397 = vunpack.c.l.b16 %v1249
          %v1398 = vunpack.c.l.b16 %v1250
          %v1399 = vunpack.c.l.b16 %v1251
          %v1400 = vunpack.c.l.b16 %v1252
          %v1401 = vunpack.c.l.b16 %v1253
          %v1402 = vunpack.c.l.b16 %v1254
          %v1403 = vunpack.c.l.b16 %v1255
          %v1404 = vunpack.c.l.b16 %v1256
          %v1405 = vunpack.c.l.b16 %v1257
          %v1406 = vunpack.c.l.b16 %v1258
          %v1407 = vunpack.c.l.b16 %v1259
          %v1408 = vunpack.c.l.b16 %v1260
          %v1409 = vunpack.c.l.b16 %v1261
          %v1410 = vunpack.c.l.b16 %v1262
          %v1411 = vunpack.c.l.b16 %v1263
          %v1412 = vunpack.c.l.b16 %v1264
          %v1413 = vunpack.c.l.b16 %v1265
          %v1414 = vunpack.c.l.b16 %v1266
          %v1415 = vunpack.c.l.b16 %v1267
          %v1416 = vunpack.c.l.b16 %v1268
          %v1417 = vunpack.c.l.b16 %v1269
          %v1418 = vunpack.c.l.b16 %v1270
          %v1419 = vunpack.c.l.b16 %v1271
          %v1420 = vunpack.c.l.b16 %v1272
          %v1421 = vpack.c.b16 %v1390, %v1389
          %v1422 = vpack.c.b16 %v1392, %v1391
          %v1423 = vpack.c.b16 %v1394, %v1393
          %v1424 = vpack.c.b16 %v1396, %v1395
          %v1425 = vpack.c.b16 %v1398, %v1397
          %v1426 = vpack.c.b16 %v1400, %v1399
          %v1427 = vpack.c.b16 %v1402, %v1401
          %v1428 = vpack.c.b16 %v1404, %v1403
          %v1429 = vpack.c.b16 %v1406, %v1405
          %v1430 = vpack.c.b16 %v1408, %v1407
          %v1431 = vpack.c.b16 %v1410, %v1409
          %v1432 = vpack.c.b16 %v1412, %v1411
          %v1433 = vpack.c.b16 %v1414, %v1413
          %v1434 = vpack.c.b16 %v1416, %v1415
          %v1435 = vpack.c.b16 %v1418, %v1417
          %v1436 = vpack.c.b16 %v1420, %v1419
          %1453 = vmatpush.bf16.msra.mxu0 %v1428
          %1454 = vmatpush.bf16.msra.mxu0 %v1427
          %1455 = vmatpush.bf16.msra.mxu0 %v1426
          %1456 = vmatpush.bf16.msra.mxu0 %v1425
          %1457 = vmatpush.bf16.msra.mxu0 %v1424
          %1458 = vmatpush.bf16.msra.mxu0 %v1423
          %1459 = vmatpush.bf16.msra.mxu0 %v1422
          %1460 = vmatpush.bf16.msra.mxu0 %v1421
          %1461 = vmatmul.bf16.gmra.mxu0 %v1325
          %v1462 = vpop.f32.mrf.mxu0
          %v1463 = vadd.f32 %v1275, %v1462
          %v1464 = vpop.f32.mrf.mxu0
          %v1465 = vadd.f32 %v1275, %v1464
          %1466 = vmatmul.bf16.gmra.mxu0 %v1327
          %v1467 = vpop.f32.mrf.mxu0
          %v1468 = vadd.f32 %v1275, %v1467
          %v1469 = vpop.f32.mrf.mxu0
          %v1470 = vadd.f32 %v1275, %v1469
          %1471 = vmatmul.bf16.gmra.mxu0 %v1329
          %v1472 = vpop.f32.mrf.mxu0
          %v1473 = vadd.f32 %v1275, %v1472
          %v1474 = vpop.f32.mrf.mxu0
          %v1475 = vadd.f32 %v1275, %v1474
          %1476 = vmatmul.bf16.gmra.mxu0 %v1331
          %v1477 = vpop.f32.mrf.mxu0
          %v1478 = vadd.f32 %v1275, %v1477
          %v1479 = vpop.f32.mrf.mxu0
          %v1480 = vadd.f32 %v1275, %v1479
          %1481 = vmatmul.bf16.gmra.mxu0 %v1333
          %v1482 = vpop.f32.mrf.mxu0
          %v1483 = vadd.f32 %v1275, %v1482
          %v1484 = vpop.f32.mrf.mxu0
          %v1485 = vadd.f32 %v1275, %v1484
          %1486 = vmatmul.bf16.gmra.mxu0 %v1335
          %v1487 = vpop.f32.mrf.mxu0
          %v1488 = vadd.f32 %v1275, %v1487
          %v1489 = vpop.f32.mrf.mxu0
          %v1490 = vadd.f32 %v1275, %v1489
          %1491 = vmatmul.bf16.gmra.mxu0 %v1337
          %v1492 = vpop.f32.mrf.mxu0
          %v1493 = vadd.f32 %v1275, %v1492
          %v1494 = vpop.f32.mrf.mxu0
          %v1495 = vadd.f32 %v1275, %v1494
          %1496 = vmatmul.bf16.gmra.mxu0 %v1339
          %v1497 = vpop.f32.mrf.mxu0
          %v1498 = vadd.f32 %v1275, %v1497
          %v1499 = vpop.f32.mrf.mxu0
          %v1500 = vadd.f32 %v1275, %v1499
          %1501 = vdwg.mxu0
          %1502 = vmatpush.bf16.msra.mxu0 %v1436
          %1503 = vmatpush.bf16.msra.mxu0 %v1435
          %1504 = vmatpush.bf16.msra.mxu0 %v1434
          %1505 = vmatpush.bf16.msra.mxu0 %v1433
          %1506 = vmatpush.bf16.msra.mxu0 %v1432
          %1507 = vmatpush.bf16.msra.mxu0 %v1431
          %1508 = vmatpush.bf16.msra.mxu0 %v1430
          %1509 = vmatpush.bf16.msra.mxu0 %v1429
          %1510 = vmatmul.bf16.gmra.mxu0 %v1326
          %v1511 = vpop.f32.mrf.mxu0
          %v1512 = vadd.f32 %v1463, %v1511
          %v1513 = vpop.f32.mrf.mxu0
          %v1514 = vadd.f32 %v1465, %v1513
          %1515 = vmatmul.bf16.gmra.mxu0 %v1328
          %v1516 = vpop.f32.mrf.mxu0
          %v1517 = vadd.f32 %v1468, %v1516
          %v1518 = vpop.f32.mrf.mxu0
          %v1519 = vadd.f32 %v1470, %v1518
          %1520 = vmatmul.bf16.gmra.mxu0 %v1330
          %v1521 = vpop.f32.mrf.mxu0
          %v1522 = vadd.f32 %v1473, %v1521
          %v1523 = vpop.f32.mrf.mxu0
          %v1524 = vadd.f32 %v1475, %v1523
          %1525 = vmatmul.bf16.gmra.mxu0 %v1332
          %v1526 = vpop.f32.mrf.mxu0
          %v1527 = vadd.f32 %v1478, %v1526
          %v1528 = vpop.f32.mrf.mxu0
          %v1529 = vadd.f32 %v1480, %v1528
          %1530 = vmatmul.bf16.gmra.mxu0 %v1334
          %v1531 = vpop.f32.mrf.mxu0
          %v1532 = vadd.f32 %v1483, %v1531
          %v1533 = vpop.f32.mrf.mxu0
          %v1534 = vadd.f32 %v1485, %v1533
          %1535 = vmatmul.bf16.gmra.mxu0 %v1336
          %v1536 = vpop.f32.mrf.mxu0
          %v1537 = vadd.f32 %v1488, %v1536
          %v1538 = vpop.f32.mrf.mxu0
          %v1539 = vadd.f32 %v1490, %v1538
          %1540 = vmatmul.bf16.gmra.mxu0 %v1338
          %v1541 = vpop.f32.mrf.mxu0
          %v1542 = vadd.f32 %v1493, %v1541
          %v1543 = vpop.f32.mrf.mxu0
          %v1544 = vadd.f32 %v1495, %v1543
          %1545 = vmatmul.bf16.gmra.mxu0 %v1340
          %v1546 = vpop.f32.mrf.mxu0
          %v1547 = vadd.f32 %v1498, %v1546
          %v1548 = vpop.f32.mrf.mxu0
          %v1549 = vadd.f32 %v1500, %v1548
          %1550 = vdwg.mxu0
          %v1551 = vmax.f32 %v1512, 0.0
          %v1552 = vmax.f32 %v1514, 0.0
          %v1553 = vmax.f32 %v1517, 0.0
          %v1554 = vmax.f32 %v1519, 0.0
          %v1555 = vmax.f32 %v1522, 0.0
          %v1556 = vmax.f32 %v1524, 0.0
          %v1557 = vmax.f32 %v1527, 0.0
          %v1558 = vmax.f32 %v1529, 0.0
          %v1559 = vmax.f32 %v1532, 0.0
          %v1560 = vmax.f32 %v1534, 0.0
          %v1561 = vmax.f32 %v1537, 0.0
          %v1562 = vmax.f32 %v1539, 0.0
          %v1563 = vmax.f32 %v1542, 0.0
          %v1564 = vmax.f32 %v1544, 0.0
          %v1565 = vmax.f32 %v1547, 0.0
          %v1566 = vmax.f32 %v1549, 0.0
          %v1567 = vld [vmem:[#allocation4] sm:$0x3]
          %v1568 = vld [vmem:[%s406] sm:$0x3]
          %1569 = vmatpush.msra.mxu0 %v1566
          %1570 = vmatpush.msra.mxu0 %v1565
          %1571 = vmatpush.msra.mxu0 %v1564
          %1572 = vmatpush.msra.mxu0 %v1563
          %1573 = vmatpush.msra.mxu0 %v1562
          %1574 = vmatpush.msra.mxu0 %v1561
          %1575 = vmatpush.msra.mxu0 %v1560
          %1576 = vmatpush.msra.mxu0 %v1559
          %1577 = vmatpush.msra.mxu0 %v1558
          %1578 = vmatpush.msra.mxu0 %v1557
          %1579 = vmatpush.msra.mxu0 %v1556
          %1580 = vmatpush.msra.mxu0 %v1555
          %1581 = vmatpush.msra.mxu0 %v1554
          %1582 = vmatpush.msra.mxu0 %v1553
          %1583 = vmatpush.msra.mxu0 %v1552
          %1584 = vmatpush.msra.mxu0 %v1551
          %1585 = vmatmul.f32.gmra.mxu0 %v1568
          %v1586 = vpop.f32.mrf.mxu0
          %v1587 = vadd.f32 0.0, %v1586
          %1588 = vdwg.mxu0
          %v1589 = vadd.f32 %v1567, %v1587
          %1590 = vst [vmem:[#allocation4] sm:$0x3] %v1589
        $region76: #{gcn_forward.1} parent=63 // pred_fallthru
          _
        %p1591 = scmp.eq.s32.totalorder %s28, 1
        %p1592 = pnand %p1237, %p1591
        %p1593 = pneg %p1592
        // Predicated region
        $region77: #{gcn_forward.1} parent=63 // pred_check
          _
        $region78: #{gcn_forward.1} parent=63 // pred_check_branch
          %1595 = sbr.rel (%p1592) target = $region80
        $region79: #{gcn_forward.1} parent=63 // pred_region
          %v1596 = vld [vmem:[#allocation4] sm:$0x3]
          %v1597 = vld [vmem:[%s8] sm:$0xff]
          %v1598 = vld [vmem:[%s8 + $0x8] sm:$0xff]
          %v1599 = vld [vmem:[%s8 + $0x10] sm:$0xff]
          %v1600 = vld [vmem:[%s8 + $0x18] sm:$0xff]
          %v1601 = vld [vmem:[%s8 + $0x20] sm:$0xff]
          %v1602 = vld [vmem:[%s8 + $0x28] sm:$0xff]
          %v1603 = vld [vmem:[%s8 + $0x30] sm:$0xff]
          %v1604 = vld [vmem:[%s8 + $0x38] sm:$0xff]
          %v1605 = vld [vmem:[%s8 + $0x40] sm:$0xff]
          %v1606 = vld [vmem:[%s8 + $0x48] sm:$0xff]
          %v1607 = vld [vmem:[%s8 + $0x50] sm:$0xff]
          %v1608 = vld [vmem:[%s8 + $0x58] sm:$0xff]
          %v1609 = vld [vmem:[%s8 + $0x60] sm:$0xff]
          %v1610 = vld [vmem:[%s8 + $0x68] sm:$0xff]
          %v1611 = vld [vmem:[%s8 + $0x70] sm:$0xff]
          %v1612 = vld [vmem:[%s8 + $0x78] sm:$0xff]
          %v1613 = vld [vmem:[%s3] sm:$0x3]
          %v1614 = vld [vmem:[%s9] sm:$0x7]
          %vm1615 = vcmask 23552
          %v1617 = vsel %vm1615, %v1613, 0
          %vm1619 = vcmask 1042432
          %v1621 = vsel %vm1619, %v1614, 0
          %1623 = vmatpush.msra.mxu0 0.0
          %1624 = vmatpush.msra.mxu0 0.0
          %1625 = vmatpush.msra.mxu0 0.0
          %1626 = vmatpush.msra.mxu0 0.0
          %1627 = vmatpush.msra.mxu0 0.0
          %1628 = vmatpush.msra.mxu0 0.0
          %1629 = vmatpush.msra.mxu0 0.0
          %1630 = vmatpush.msra.mxu0 0.0
          %1631 = vmatpush.msra.mxu0 0.0
          %1632 = vmatpush.msra.mxu0 0.0
          %1633 = vmatpush.msra.mxu0 0.0
          %1634 = vmatpush.msra.mxu0 0.0
          %1635 = vmatpush.msra.mxu0 0.0
          %1636 = vmatpush.msra.mxu0 0.0
          %1637 = vmatpush.msra.mxu0 0.0
          %1638 = vmatpush.msra.mxu0 %v1621
          %1639 = vmatmul.f32.gmra.mxu0 %v1617
          %v1640 = vpop.f32.mrf.mxu0
          %v1641 = vadd.f32 0.0, %v1640
          %1642 = vdwg.mxu0
          %1643 = vmatpush.msra.mxu0 %v1612
          %1644 = vmatpush.msra.mxu0 %v1611
          %1645 = vmatpush.msra.mxu0 %v1610
          %1646 = vmatpush.msra.mxu0 %v1609
          %1647 = vmatpush.msra.mxu0 %v1608
          %1648 = vmatpush.msra.mxu0 %v1607
          %1649 = vmatpush.msra.mxu0 %v1606
          %1650 = vmatpush.msra.mxu0 %v1605
          %1651 = vmatpush.msra.mxu0 %v1604
          %1652 = vmatpush.msra.mxu0 %v1603
          %1653 = vmatpush.msra.mxu0 %v1602
          %1654 = vmatpush.msra.mxu0 %v1601
          %1655 = vmatpush.msra.mxu0 %v1600
          %1656 = vmatpush.msra.mxu0 %v1599
          %1657 = vmatpush.msra.mxu0 %v1598
          %1658 = vmatpush.msra.mxu0 %v1597
          %1659 = vmatmul.f32.gmra.mxu0 %v1596
          %v1660 = vpop.f32.mrf.mxu0
          %v1661 = vadd.f32 %v1641, %v1660
          %1662 = vdwg.mxu0
          %v1663 = vld [vmem:[%s10] sm:$0x1]
          %v1665 = vperm.slane %v1663, 0
          %v1667 = vadd.f32 %v1661, %v1665
          %v1668 = vlaneseq
          %v1669 = vand.u32 %v1668, 127
          %vm1670 = vcmp.lt.s32.totalorder %v1669, 5
          %v1671 = vsel %vm1670, %v1667, -inf
          %vm1672 = vcmask 1041408
          %v1673 = vsel %vm1672, %v1671, -inf
          %1674 = vmax.xlane.f32.xlu0 %v1673
          %v1675 = vpop.xlane.xlu0 %1674
          %v1676 = vsub.f32 %v1671, %v1675
          %v1677 = vmul.f32 %v1676, 1.442695
          %v1678 = vpow.pop %v1677
          %v1679 = vsel %vm1672, %v1678, 0.0
          %1680 = vadd.xlane.f32.xlu0 %v1679
          %v1681 = vpop.xlane.xlu0 %1680
          %v1682 = vlog2.pop %v1681
          %v1683 = vmul.f32 %v1682, 0.6931472
          %v1684 = vadd.f32 %v1683, %v1675
          %v1685 = vsub.f32 %v1671, %v1684
          %1686 = vst [vmem:[#allocation5] sm:$0x3] %v1685
        $region80: #{gcn_forward.1} parent=63 // pred_fallthru
          _
        // Predicated region
        $region81: #{gcn_forward.1} parent=63 // pred_check
          %p1687 = pneg %p289
        $region82: #{gcn_forward.1} parent=63 // pred_check_branch
          %1689 = sbr.rel (%p1687) target = $region84
        $region83: #{gcn_forward.1} parent=63 // pred_region
          %1691 = vsyncadd [#allocation6], 0
          %s1693 = sshll.u32 [#allocation5], 4
          %s1694 = int_to_ptr.vmem [resolvable:$true] %s1693
          %s1695 = sshll.u32 %s11, 4
          %s1696 = int_to_ptr.hbm [resolvable:$true] %s1695
          %1698 = dma.vmem_to_hbm [thread:$0]  %s1694, 32, %s1696, [#allocation6]
        $region84: #{gcn_forward.1} parent=63 // pred_fallthru
          _
        // Predicated region
        $region85: #{gcn_forward.1} parent=63 // pred_check
          %p1699 = pneg %p289
        $region86: #{gcn_forward.1} parent=63 // pred_check_branch
          %1701 = sbr.rel (%p1699) target = $region88
        $region87: #{gcn_forward.1} parent=63 // pred_region
          %1703 = dma.done [#allocation6], 32
        $region88: #{gcn_forward.1} parent=63 // pred_fallthru
          _
      $region64: #{gcn_forward.1} parent=5 // pred_fallthru
        _
      %p1704 = scmp.le.s32.totalorder 2, %s18
      // Predicated region
      $region89: #{gcn_forward.1} parent=5 // pred_check
        %p1705 = pneg %p1704
      $region90: #{gcn_forward.1} parent=5 // pred_check_branch
        %1707 = sbr.rel (%p1705) target = $region92
      $region91: #{gcn_forward.1} parent=5 // pred_region
        %s1708 = ssub.s32 %s18, 2
      $region92: #{gcn_forward.1} parent=5 // pred_fallthru
        _
    $region6: #{gcn_forward.1} parent=1 // loop_footer
      %s22 = sadd.s32 1, %s18
    $region7: #{gcn_forward.1} parent=1 // loop_footer_branch
      %17 = sbr.rel target = $region3
    $region8: #{gcn_forward.1} parent=1 // loop_exit
      _
    %1709 = vsyncpa [#allocation6], 1
    %s1710 = scalar_lea.sflag [#allocation6], 1
    %1711 = vsyncpa %s1710, 1

</llo_original>
